<compile_context>
chip_gen: v7x
topology: tpu7x:2x2x1
jax: 0.10.0
libtpu: 0.0.40
codegen_flags: <defaults>
</compile_context>

<pallas_src>
import functools

import jax
import jax.numpy as jnp
import numpy as np
from jax import lax
from jax.experimental import pallas as pl
from jax.experimental.pallas import tpu as pltpu


def _pshead_kernel(x_ref, w_ref, logit_ref, prob_ref, col_ref, *, wp: int):
    """One grid step = `bn` images folded into the matmul RHS.

    x_ref     : (Cin, IN_W)     bf16 zero-padded input, per-image stride IMG,
                                plus a 128-col zero tail (absorbs last tap shift).
    w_ref     : (Cout, 9*Cin)   bf16 fused slot+mark weights, taps stacked on K.
    logit_ref : (Cout, OUT_W)   f32, OUT_W = bn*IMG (multiple of 128, lane-dense).
    prob_ref  : (Cout, OUT_W)   f32 sigmoid(logits).
    col_ref   : (9*Cin, OUT_W)  bf16 VMEM im2col scratch.
    """
    cin = x_ref.shape[0]
    out_w = logit_ref.shape[-1]

    # 9-tap im2col: each tap is a pure lane shift of the whole batch-folded
    # input (no per-image strided slices); stored once into the scratch so the
    # 3x3 conv collapses into a single deep matmul.
    for dy in range(3):
        for dx in range(3):
            tap = dy * 3 + dx
            off = dy * wp + dx
            col_ref[tap * cin:(tap + 1) * cin, :] = x_ref[:, off:off + out_w]

    # One K = 9*Cin MXU matmul, bf16 operands, f32 accumulation.
    acc = jnp.dot(w_ref[...], col_ref[...], preferred_element_type=jnp.float32)
    logit_ref[...] = acc

    # sigmoid = 1 / (1 + exp(-x)): exp on the EUP, approximate reciprocal also
    # on the EUP slot -> epilogue stays off the VPU.
    prob_ref[...] = pl.reciprocal(1.0 + jnp.exp(-acc), approx=True)


def _round_up(v: int, m: int) -> int:
    return (v + m - 1) // m * m


def _tensorcores_per_chip() -> int:
    """Best-effort TensorCores-per-chip query. Perf-only; safe fallback = 1."""
    try:
        info = pltpu.get_tpu_info()
        for attr in ("num_cores", "tensorcores_per_chip", "cores_per_chip",
                     "num_tensorcores"):
            v = getattr(info, attr, None)
            if isinstance(v, int) and v > 0:
                return v
    except Exception:
        pass
    try:
        v = getattr(jax.devices()[0], "num_cores", None)
        if isinstance(v, int) and v > 0:
            return v
    except Exception:
        pass
    return 1


def _pick_num_steps(n: int, n_cores: int) -> int:
    # Multi-TC (v7x-class): one big step per core so the "parallel" grid axis
    # shards the batch and each core pays one pipeline-step overhead.
    if n_cores > 1 and n >= n_cores and n % n_cores == 0:
        return n_cores
    # Single TC: once the batch grows, keep >=2 steps so step i+1's input DMA
    # is double-buffered behind step i's compute. At tiny N fold everything.
    if n >= 4 and n % 2 == 0:
        return 2
    return 1


@functools.partial(jax.jit, static_argnames=("slot_channel", "mark_channel"))
def pshead_v2_forward(x_nchw, w_slot, w_mark, *, slot_channel=6, mark_channel=5):
    """x_nchw: (N, Cin, H, W) f32. w_slot: (slot, Cin, 3, 3). w_mark: (mark, Cin, 3, 3).

    Returns (slot_out, mark_out, slot_logit, mark_logit), all NCHW like PyTorch.
    """
    N, Cin, H, W = x_nchw.shape
    Cout = slot_channel + mark_channel

    Wp = W + 2                        # padded row stride: 1 left + 1 right zero col
    rows = H + 3                      # 1 top + H data + 2 bottom zero rows
    img = _round_up(rows * Wp, 128)   # per-image column stride (lane-dense)
    max_off = 2 * Wp + 2              # largest tap lane shift

    num_steps = _pick_num_steps(N, _tensorcores_per_chip())
    bn = N // num_steps
    out_w = bn * img                            # output cols per step (mult. of 128)
    in_w = out_w + _round_up(max_off, 128)      # + zero tail so last tap slice is in-bounds

    # ---- operand prep (NCHW-native, no NCHW<->NHWC transposes) ----------------
    # Zero-pad spatially, flatten with row stride Wp, pad each image to `img`.
    x_pad = jnp.pad(x_nchw, ((0, 0), (0, 0), (1, 2), (1, 1)))
    x_pad = x_pad.reshape(N, Cin, rows * Wp)
    x_pad = jnp.pad(x_pad, ((0, 0), (0, 0), (0, img - rows * Wp)))
    # Fold bn images into the matmul RHS: (steps, Cin, bn*img) + zero tail.
    x_pad = x_pad.reshape(num_steps, bn, Cin, img).transpose(0, 2, 1, 3)
    x_pad = x_pad.reshape(num_steps, Cin, out_w)
    x_pad = jnp.pad(x_pad, ((0, 0), (0, 0), (0, in_w - out_w)))
    x_pad = x_pad.astype(jnp.bfloat16)          # bf16 MXU operands, f32 accumulate

    # Fuse slot+mark weights and stack the 9 taps on the contraction dim:
    # (Cout, Cin, 3, 3) -> (Cout, 9*Cin), flat k = (dy*3+dx)*Cin + cin.
    w_all = jnp.concatenate([w_slot, w_mark], axis=0)
    w_all = jnp.transpose(w_all, (0, 2, 3, 1)).reshape(Cout, 9 * Cin)
    w_all = w_all.astype(jnp.bfloat16)

    kernel = functools.partial(_pshead_kernel, wp=Wp)

    cost = pl.CostEstimate(
        flops=2 * num_steps * Cout * 9 * Cin * out_w,
        transcendentals=num_steps * Cout * out_w,
        bytes_accessed=2 * (num_steps * Cin * in_w + Cout * 9 * Cin)
                       + 4 * 2 * num_steps * Cout * out_w,
    )

    logit, prob = pl.pallas_call(
        kernel,
        out_shape=(
            jax.ShapeDtypeStruct((num_steps, Cout, out_w), jnp.float32),
            jax.ShapeDtypeStruct((num_steps, Cout, out_w), jnp.float32),
        ),
        grid_spec=pltpu.PrefetchScalarGridSpec(
            num_scalar_prefetch=0,
            grid=(num_steps,),
            in_specs=[
                pl.BlockSpec((None, Cin, in_w), lambda s: (s, 0, 0)),
                pl.BlockSpec((Cout, 9 * Cin), lambda s: (0, 0)),   # weights resident
            ],
            out_specs=[
                pl.BlockSpec((None, Cout, out_w), lambda s: (s, 0, 0)),
                pl.BlockSpec((None, Cout, out_w), lambda s: (s, 0, 0)),
            ],
            scratch_shapes=[pltpu.VMEM((9 * Cin, out_w), jnp.bfloat16)],
        ),
        compiler_params=pltpu.CompilerParams(
            dimension_semantics=("parallel",)),
        cost_estimate=cost,
    )(x_pad, w_all)

    # Split images, drop the padded-stride junk rows/cols, split slot/mark.
    # Cheap XLA slices on tiny outputs; results are already NCHW-native.
    def unpack(t):
        t = t.reshape(num_steps, Cout, bn, img).transpose(0, 2, 1, 3)
        t = t.reshape(N, Cout, img)[:, :, :H * Wp]
        t = t.reshape(N, Cout, H, Wp)[:, :, :, :W]
        return t[:, :slot_channel], t[:, slot_channel:]

    slot_logit, mark_logit = unpack(logit)
    slot_out, mark_out = unpack(prob)
    return slot_out, mark_out, slot_logit, mark_logit


def _reference(x_nchw, w_slot, w_mark):
    """Pure-JAX reference (mirrors PyTorch F.conv2d padding=1 semantics, NCHW)."""
    dn = lax.conv_dimension_numbers(x_nchw.shape, w_slot.shape,
                                    ("NCHW", "OIHW", "NCHW"))
    conv = lambda w: lax.conv_general_dilated(
        x_nchw, w, window_strides=(1, 1), padding="SAME", dimension_numbers=dn)
    slot_logit = conv(w_slot)
    mark_logit = conv(w_mark)
    return (jax.nn.sigmoid(slot_logit), jax.nn.sigmoid(mark_logit),
            slot_logit, mark_logit)


if __name__ == "__main__":
    # Small synthetic config: hrn_out_channel=[8, 8, 16] -> ch=32,
    # feature_map_size=16, slot_channel=6, mark_channel=5, batch=2.
    N, Cin, H, W = 2, 32, 16, 16
    SLOT_CH, MARK_CH = 6, 5

    key = jax.random.PRNGKey(0)
    kx, kws, kwm = jax.random.split(key, 3)
    x = jax.random.normal(kx, (N, Cin, H, W), dtype=jnp.float32)
    w_slot = jax.random.normal(kws, (SLOT_CH, Cin, 3, 3), jnp.float32) * 0.05
    w_mark = jax.random.normal(kwm, (MARK_CH, Cin, 3, 3), jnp.float32) * 0.05

    outs = pshead_v2_forward(x, w_slot, w_mark,
                             slot_channel=SLOT_CH, mark_channel=MARK_CH)
    outs = jax.block_until_ready(outs)

    # Reference on bf16-quantized operands (the kernel's MXU matmul uses bf16
    # inputs with f32 accumulation); probs additionally pass through an
    # approximate EUP reciprocal, so they get a slightly looser tolerance.
    q = lambda t: t.astype(jnp.bfloat16).astype(jnp.float32)
    refs = _reference(q(x), q(w_slot), q(w_mark))
    tols = ((1e-2, 1e-2), (1e-2, 1e-2), (5e-3, 5e-4), (5e-3, 5e-4))
    for got, want, (rtol, atol) in zip(outs, refs, tols):
        np.testing.assert_allclose(np.asarray(got), np.asarray(want),
                                   rtol=rtol, atol=atol)

    print("KERNEL_OK")
</pallas_src>

<mosaic_0001>
module attributes {stable_mosaic.version = 11 : i64} {
  func.func @_pshead_kernel(%arg0: i32, %arg1: memref<1x32x896xbf16, #tpu.memory_space<vmem>>, %arg2: memref<11x288xbf16, #tpu.memory_space<vmem>>, %arg3: memref<1x11x768xf32, #tpu.memory_space<vmem>>, %arg4: memref<1x11x768xf32, #tpu.memory_space<vmem>>, %arg5: memref<288x768xbf16, #tpu.memory_space<vmem>>) attributes {dimension_semantics = [#tpu.dimension_semantics<parallel>], iteration_bounds = array<i64: 1>, scalar_prefetch = 0 : i64, scratch_operands = 1 : i64, tpu.core_type = #tpu.core_type<tc>, window_params = [{transform_indices = @transform_0, window_bounds = array<i64: 1, 32, 896>}, {pipeline_mode = #tpu.pipeline_mode<synchronous>, transform_indices = @transform_1, window_bounds = array<i64: 11, 288>}, {transform_indices = @transform_2, window_bounds = array<i64: 1, 11, 768>}, {transform_indices = @transform_3, window_bounds = array<i64: 1, 11, 768>}]} {
    %c0 = arith.constant 0 : index
    %c0_0 = arith.constant 0 : index
    %c0_1 = arith.constant 0 : index
    %0 = vector.load %arg1[%c0, %c0_0, %c0_1] : memref<1x32x896xbf16, #tpu.memory_space<vmem>>, vector<1x32x768xbf16>
    %1 = vector.shape_cast %0 : vector<1x32x768xbf16> to vector<32x768xbf16>
    %c0_2 = arith.constant 0 : index
    %c0_3 = arith.constant 0 : index
    %2 = vector.load %arg5[%c0_2, %c0_3] : memref<288x768xbf16, #tpu.memory_space<vmem>>, vector<32x768xbf16>
    tpu.vector_store %arg5[%c0_2, %c0_3], %1 {strides = array<i32>} : memref<288x768xbf16, #tpu.memory_space<vmem>>, vector<32x768xbf16>,
    %c0_4 = arith.constant 0 : index
    %c0_5 = arith.constant 0 : index
    %c1 = arith.constant 1 : index
    %3 = vector.load %arg1[%c0_4, %c0_5, %c1] : memref<1x32x896xbf16, #tpu.memory_space<vmem>>, vector<1x32x768xbf16>
    %4 = vector.shape_cast %3 : vector<1x32x768xbf16> to vector<32x768xbf16>
    %c32 = arith.constant 32 : index
    %c0_6 = arith.constant 0 : index
    %5 = vector.load %arg5[%c32, %c0_6] : memref<288x768xbf16, #tpu.memory_space<vmem>>, vector<32x768xbf16>
    tpu.vector_store %arg5[%c32, %c0_6], %4 {strides = array<i32>} : memref<288x768xbf16, #tpu.memory_space<vmem>>, vector<32x768xbf16>,
    %c0_7 = arith.constant 0 : index
    %c0_8 = arith.constant 0 : index
    %c2 = arith.constant 2 : index
    %6 = vector.load %arg1[%c0_7, %c0_8, %c2] : memref<1x32x896xbf16, #tpu.memory_space<vmem>>, vector<1x32x768xbf16>
    %7 = vector.shape_cast %6 : vector<1x32x768xbf16> to vector<32x768xbf16>
    %c64 = arith.constant 64 : index
    %c0_9 = arith.constant 0 : index
    %8 = vector.load %arg5[%c64, %c0_9] : memref<288x768xbf16, #tpu.memory_space<vmem>>, vector<32x768xbf16>
    tpu.vector_store %arg5[%c64, %c0_9], %7 {strides = array<i32>} : memref<288x768xbf16, #tpu.memory_space<vmem>>, vector<32x768xbf16>,
    %c0_10 = arith.constant 0 : index
    %c0_11 = arith.constant 0 : index
    %c18 = arith.constant 18 : index
    %9 = vector.load %arg1[%c0_10, %c0_11, %c18] : memref<1x32x896xbf16, #tpu.memory_space<vmem>>, vector<1x32x768xbf16>
    %10 = vector.shape_cast %9 : vector<1x32x768xbf16> to vector<32x768xbf16>
    %c96 = arith.constant 96 : index
    %c0_12 = arith.constant 0 : index
    %11 = vector.load %arg5[%c96, %c0_12] : memref<288x768xbf16, #tpu.memory_space<vmem>>, vector<32x768xbf16>
    tpu.vector_store %arg5[%c96, %c0_12], %10 {strides = array<i32>} : memref<288x768xbf16, #tpu.memory_space<vmem>>, vector<32x768xbf16>,
    %c0_13 = arith.constant 0 : index
    %c0_14 = arith.constant 0 : index
    %c19 = arith.constant 19 : index
    %12 = vector.load %arg1[%c0_13, %c0_14, %c19] : memref<1x32x896xbf16, #tpu.memory_space<vmem>>, vector<1x32x768xbf16>
    %13 = vector.shape_cast %12 : vector<1x32x768xbf16> to vector<32x768xbf16>
    %c128 = arith.constant 128 : index
    %c0_15 = arith.constant 0 : index
    %14 = vector.load %arg5[%c128, %c0_15] : memref<288x768xbf16, #tpu.memory_space<vmem>>, vector<32x768xbf16>
    tpu.vector_store %arg5[%c128, %c0_15], %13 {strides = array<i32>} : memref<288x768xbf16, #tpu.memory_space<vmem>>, vector<32x768xbf16>,
    %c0_16 = arith.constant 0 : index
    %c0_17 = arith.constant 0 : index
    %c20 = arith.constant 20 : index
    %15 = vector.load %arg1[%c0_16, %c0_17, %c20] : memref<1x32x896xbf16, #tpu.memory_space<vmem>>, vector<1x32x768xbf16>
    %16 = vector.shape_cast %15 : vector<1x32x768xbf16> to vector<32x768xbf16>
    %c160 = arith.constant 160 : index
    %c0_18 = arith.constant 0 : index
    %17 = vector.load %arg5[%c160, %c0_18] : memref<288x768xbf16, #tpu.memory_space<vmem>>, vector<32x768xbf16>
    tpu.vector_store %arg5[%c160, %c0_18], %16 {strides = array<i32>} : memref<288x768xbf16, #tpu.memory_space<vmem>>, vector<32x768xbf16>,
    %c0_19 = arith.constant 0 : index
    %c0_20 = arith.constant 0 : index
    %c36 = arith.constant 36 : index
    %18 = vector.load %arg1[%c0_19, %c0_20, %c36] : memref<1x32x896xbf16, #tpu.memory_space<vmem>>, vector<1x32x768xbf16>
    %19 = vector.shape_cast %18 : vector<1x32x768xbf16> to vector<32x768xbf16>
    %c192 = arith.constant 192 : index
    %c0_21 = arith.constant 0 : index
    %20 = vector.load %arg5[%c192, %c0_21] : memref<288x768xbf16, #tpu.memory_space<vmem>>, vector<32x768xbf16>
    tpu.vector_store %arg5[%c192, %c0_21], %19 {strides = array<i32>} : memref<288x768xbf16, #tpu.memory_space<vmem>>, vector<32x768xbf16>,
    %c0_22 = arith.constant 0 : index
    %c0_23 = arith.constant 0 : index
    %c37 = arith.constant 37 : index
    %21 = vector.load %arg1[%c0_22, %c0_23, %c37] : memref<1x32x896xbf16, #tpu.memory_space<vmem>>, vector<1x32x768xbf16>
    %22 = vector.shape_cast %21 : vector<1x32x768xbf16> to vector<32x768xbf16>
    %c224 = arith.constant 224 : index
    %c0_24 = arith.constant 0 : index
    %23 = vector.load %arg5[%c224, %c0_24] : memref<288x768xbf16, #tpu.memory_space<vmem>>, vector<32x768xbf16>
    tpu.vector_store %arg5[%c224, %c0_24], %22 {strides = array<i32>} : memref<288x768xbf16, #tpu.memory_space<vmem>>, vector<32x768xbf16>,
    %c0_25 = arith.constant 0 : index
    %c0_26 = arith.constant 0 : index
    %c38 = arith.constant 38 : index
    %24 = vector.load %arg1[%c0_25, %c0_26, %c38] : memref<1x32x896xbf16, #tpu.memory_space<vmem>>, vector<1x32x768xbf16>
    %25 = vector.shape_cast %24 : vector<1x32x768xbf16> to vector<32x768xbf16>
    %c256 = arith.constant 256 : index
    %c0_27 = arith.constant 0 : index
    %26 = vector.load %arg5[%c256, %c0_27] : memref<288x768xbf16, #tpu.memory_space<vmem>>, vector<32x768xbf16>
    tpu.vector_store %arg5[%c256, %c0_27], %25 {strides = array<i32>} : memref<288x768xbf16, #tpu.memory_space<vmem>>, vector<32x768xbf16>,
    %c0_28 = arith.constant 0 : index
    %c0_29 = arith.constant 0 : index
    %27 = vector.load %arg2[%c0_28, %c0_29] : memref<11x288xbf16, #tpu.memory_space<vmem>>, vector<11x288xbf16>
    %c0_30 = arith.constant 0 : index
    %c0_31 = arith.constant 0 : index
    %28 = vector.load %arg5[%c0_30, %c0_31] : memref<288x768xbf16, #tpu.memory_space<vmem>>, vector<288x768xbf16>
    %cst = arith.constant dense<0.000000e+00> : vector<11x768xf32>
    %29 = tpu.matmul %27, %28, %cst {dimension_numbers = #tpu.dot_dimension_numbers<[1], [0], [0], [1], [0, 0, 1, 1], [], []>} : vector<11x288xbf16>, vector<288x768xbf16>, vector<11x768xf32> -> vector<11x768xf32>
    %c0_32 = arith.constant 0 : index
    %c0_33 = arith.constant 0 : index
    %c0_34 = arith.constant 0 : index
    %30 = vector.load %arg3[%c0_32, %c0_33, %c0_34] : memref<1x11x768xf32, #tpu.memory_space<vmem>>, vector<1x11x768xf32>
    %31 = vector.shape_cast %30 : vector<1x11x768xf32> to vector<11x768xf32>
    %32 = vector.shape_cast %29 : vector<11x768xf32> to vector<1x11x768xf32>
    tpu.vector_store %arg3[%c0_32, %c0_33, %c0_34], %32 {strides = array<i32>} : memref<1x11x768xf32, #tpu.memory_space<vmem>>, vector<1x11x768xf32>,
    %cst_35 = arith.constant 0.000000e+00 : f32
    %33 = vector.broadcast %cst_35 : f32 to vector<11x768xf32>
    %34 = arith.subf %33, %29 : vector<11x768xf32>
    %35 = math.exp %34 : vector<11x768xf32>
    %cst_36 = arith.constant 1.000000e+00 : f32
    %36 = vector.broadcast %cst_36 : f32 to vector<11x768xf32>
    %37 = arith.addf %36, %35 : vector<11x768xf32>
    %38 = tpu.reciprocal %37 {approx = true} : vector<11x768xf32> -> vector<11x768xf32>
    %c0_37 = arith.constant 0 : index
    %c0_38 = arith.constant 0 : index
    %c0_39 = arith.constant 0 : index
    %39 = vector.load %arg4[%c0_37, %c0_38, %c0_39] : memref<1x11x768xf32, #tpu.memory_space<vmem>>, vector<1x11x768xf32>
    %40 = vector.shape_cast %39 : vector<1x11x768xf32> to vector<11x768xf32>
    %41 = vector.shape_cast %38 : vector<11x768xf32> to vector<1x11x768xf32>
    tpu.vector_store %arg4[%c0_37, %c0_38, %c0_39], %41 {strides = array<i32>} : memref<1x11x768xf32, #tpu.memory_space<vmem>>, vector<1x11x768xf32>,
    return
  }
  func.func @transform_0(%arg0: i32) -> (i32, i32, i32) {
    %c0_i32 = arith.constant 0 : i32
    %c0_i32_0 = arith.constant 0 : i32
    %c0_i32_1 = arith.constant 0 : i32
    return %arg0, %c0_i32, %c0_i32_0 : i32, i32, i32
  }
  func.func @transform_1(%arg0: i32) -> (i32, i32) {
    %c0_i32 = arith.constant 0 : i32
    %c0_i32_0 = arith.constant 0 : i32
    %c0_i32_1 = arith.constant 0 : i32
    return %c0_i32, %c0_i32_0 : i32, i32
  }
  func.func @transform_2(%arg0: i32) -> (i32, i32, i32) {
    %c0_i32 = arith.constant 0 : i32
    %c0_i32_0 = arith.constant 0 : i32
    %c0_i32_1 = arith.constant 0 : i32
    return %arg0, %c0_i32, %c0_i32_0 : i32, i32, i32
  }
  func.func @transform_3(%arg0: i32) -> (i32, i32, i32) {
    %c0_i32 = arith.constant 0 : i32
    %c0_i32_0 = arith.constant 0 : i32
    %c0_i32_1 = arith.constant 0 : i32
    return %arg0, %c0_i32, %c0_i32_0 : i32, i32, i32
  }
}

</mosaic_0001>

<llo_original>
// kernel: pshead_v2_forward.1
$region0: #{pshead_v2_forward.1}
  #allocation0 [shape = 'u32[]', space=smem, size = 0x4, offset = 0x4, fixed_abs, tag = 'smem constant byte address 0x4 - core index']
  #allocation1 [shape = 'u32[144,128]{1,0:T(1,128)}', space=vmem, size = 0x12000, scoped, tag = 'internal scratch']
  #allocation2 [shape = 'bf16[288,768]{1,0:T(16,128)(2,1)}', space=vmem, size = 0x6c000, scoped, tag = 'scratch operand']
  %s0 = inlined_call_operand.vmem [shape: bf16[1,32,896], index: 0, kind: input, shape index: {}]
  %s1 = inlined_call_operand.vmem [shape: bf16[11,288], index: 1, kind: input, shape index: {}]
  %s2 = inlined_call_operand.vmem [shape: f32[1,11,768], index: 2, kind: output, shape index: {0}]
  %s3 = inlined_call_operand.vmem [shape: f32[1,11,768], index: 3, kind: output, shape index: {1}]
  %4 = xla_tuple %s2, %s3
  %s5 = sld [smem:[#allocation0]]
  $region26: #{pshead_v2_forward.1} parent=0
    _
  %s7 = ssub.s32 1, %s5
  %s8 = scalar_select 0, %s7, %s5
  // Predicated region
  $region2: #{pshead_v2_forward.1} parent=0 // pred_check
    _
  $region3: #{pshead_v2_forward.1} parent=0 // pred_check_branch
    %10 = sbr.rel (0) target = $region5
  $region4: #{pshead_v2_forward.1} parent=0 // pred_region
    _
  $region5: #{pshead_v2_forward.1} parent=0 // pred_fallthru
    _
  // Predicated region
  $region6: #{pshead_v2_forward.1} parent=0 // pred_check
    _
  $region7: #{pshead_v2_forward.1} parent=0 // pred_check_branch
    %12 = sbr.rel (0) target = $region9
  $region8: #{pshead_v2_forward.1} parent=0 // pred_region
    _
  $region9: #{pshead_v2_forward.1} parent=0 // pred_fallthru
    _
  %v14 = vld [vmem:[%s0] sm:$0xff]
  %v15 = vld [vmem:[%s0 + $0x8] sm:$0xff]
  %v16 = vld [vmem:[%s0 + $0x10] sm:$0xff]
  %v17 = vld [vmem:[%s0 + $0x1c] sm:$0xff]
  %v18 = vld [vmem:[%s0 + $0x24] sm:$0xff]
  %v19 = vld [vmem:[%s0 + $0x2c] sm:$0xff]
  %v20 = vld [vmem:[%s0 + $0x38] sm:$0xff]
  %v21 = vld [vmem:[%s0 + $0x40] sm:$0xff]
  %v22 = vld [vmem:[%s0 + $0x48] sm:$0xff]
  %v23 = vld [vmem:[%s0 + $0x54] sm:$0xff]
  %v24 = vld [vmem:[%s0 + $0x5c] sm:$0xff]
  %v25 = vld [vmem:[%s0 + $0x64] sm:$0xff]
  %v38 = vunpack.c.l.b16 %v14
  %v39 = vunpack.c.h.b16 %v14
  %v40 = vunpack.c.l.b16 %v15
  %v41 = vunpack.c.h.b16 %v15
  %v42 = vunpack.c.l.b16 %v16
  %v43 = vunpack.c.h.b16 %v16
  %v44 = vunpack.c.l.b16 %v17
  %v45 = vunpack.c.h.b16 %v17
  %v46 = vunpack.c.l.b16 %v18
  %v47 = vunpack.c.h.b16 %v18
  %v48 = vunpack.c.l.b16 %v19
  %v49 = vunpack.c.h.b16 %v19
  %v50 = vunpack.c.l.b16 %v20
  %v51 = vunpack.c.h.b16 %v20
  %v52 = vunpack.c.l.b16 %v21
  %v53 = vunpack.c.h.b16 %v21
  %v54 = vunpack.c.l.b16 %v22
  %v55 = vunpack.c.h.b16 %v22
  %v56 = vunpack.c.l.b16 %v23
  %v57 = vunpack.c.h.b16 %v23
  %v58 = vunpack.c.l.b16 %v24
  %v59 = vunpack.c.h.b16 %v24
  %v60 = vunpack.c.l.b16 %v25
  %v61 = vunpack.c.h.b16 %v25
  %v62 = vpack.c.b16 %v44, %v38
  %v63 = vpack.c.b16 %v45, %v39
  %v64 = vpack.c.b16 %v46, %v40
  %v65 = vpack.c.b16 %v47, %v41
  %v66 = vpack.c.b16 %v48, %v42
  %v67 = vpack.c.b16 %v49, %v43
  %v68 = vpack.c.b16 %v56, %v50
  %v69 = vpack.c.b16 %v57, %v51
  %v70 = vpack.c.b16 %v58, %v52
  %v71 = vpack.c.b16 %v59, %v53
  %v72 = vpack.c.b16 %v60, %v54
  %v73 = vpack.c.b16 %v61, %v55
  %86 = vst [vmem:[#allocation2] sm:$0xff] %v62
  %87 = vst [vmem:[#allocation2 + $0x8] sm:$0xff] %v63
  %88 = vst [vmem:[#allocation2 + $0x10] sm:$0xff] %v64
  %89 = vst [vmem:[#allocation2 + $0x18] sm:$0xff] %v65
  %90 = vst [vmem:[#allocation2 + $0x20] sm:$0xff] %v66
  %91 = vst [vmem:[#allocation2 + $0x28] sm:$0xff] %v67
  %92 = vst [vmem:[#allocation2 + $0x30] sm:$0xff] %v68
  %93 = vst [vmem:[#allocation2 + $0x38] sm:$0xff] %v69
  %94 = vst [vmem:[#allocation2 + $0x40] sm:$0xff] %v70
  %95 = vst [vmem:[#allocation2 + $0x48] sm:$0xff] %v71
  %96 = vst [vmem:[#allocation2 + $0x50] sm:$0xff] %v72
  %97 = vst [vmem:[#allocation2 + $0x58] sm:$0xff] %v73
  %v98 = vld [vmem:[%s0] sm:$0xff]
  %v99 = vld [vmem:[%s0 + $0x8] sm:$0xff]
  %v100 = vld [vmem:[%s0 + $0x10] sm:$0xff]
  %v101 = vld [vmem:[%s0 + $0x18] sm:$0xf]
  %v102 = vld [vmem:[%s0 + $0x1c] sm:$0xff]
  %v103 = vld [vmem:[%s0 + $0x24] sm:$0xff]
  %v104 = vld [vmem:[%s0 + $0x2c] sm:$0xff]
  %v105 = vld [vmem:[%s0 + $0x34] sm:$0xf]
  %v106 = vld [vmem:[%s0 + $0x38] sm:$0xff]
  %v107 = vld [vmem:[%s0 + $0x40] sm:$0xff]
  %v108 = vld [vmem:[%s0 + $0x48] sm:$0xff]
  %v109 = vld [vmem:[%s0 + $0x50] sm:$0xf]
  %v110 = vld [vmem:[%s0 + $0x54] sm:$0xff]
  %v111 = vld [vmem:[%s0 + $0x5c] sm:$0xff]
  %v112 = vld [vmem:[%s0 + $0x64] sm:$0xff]
  %v113 = vld [vmem:[%s0 + $0x6c] sm:$0xf]
  %v130 = vunpack.c.l.b16 %v98
  %v131 = vunpack.c.h.b16 %v98
  %v132 = vunpack.c.l.b16 %v99
  %v133 = vunpack.c.h.b16 %v99
  %v134 = vunpack.c.l.b16 %v100
  %v135 = vunpack.c.h.b16 %v100
  %v136 = vunpack.c.l.b16 %v101
  %v137 = vunpack.c.l.b16 %v102
  %v138 = vunpack.c.h.b16 %v102
  %v139 = vunpack.c.l.b16 %v103
  %v140 = vunpack.c.h.b16 %v103
  %v141 = vunpack.c.l.b16 %v104
  %v142 = vunpack.c.h.b16 %v104
  %v143 = vunpack.c.l.b16 %v105
  %v144 = vunpack.c.l.b16 %v106
  %v145 = vunpack.c.h.b16 %v106
  %v146 = vunpack.c.l.b16 %v107
  %v147 = vunpack.c.h.b16 %v107
  %v148 = vunpack.c.l.b16 %v108
  %v149 = vunpack.c.h.b16 %v108
  %v150 = vunpack.c.l.b16 %v109
  %v151 = vunpack.c.l.b16 %v110
  %v152 = vunpack.c.h.b16 %v110
  %v153 = vunpack.c.l.b16 %v111
  %v154 = vunpack.c.h.b16 %v111
  %v155 = vunpack.c.l.b16 %v112
  %v156 = vunpack.c.h.b16 %v112
  %v157 = vunpack.c.l.b16 %v113
  %v158 = vpack.c.b16 %v137, %v130
  %v159 = vpack.c.b16 %v138, %v131
  %v160 = vpack.c.b16 %v139, %v132
  %v161 = vpack.c.b16 %v140, %v133
  %v162 = vpack.c.b16 %v141, %v134
  %v163 = vpack.c.b16 %v142, %v135
  %v164 = vpack.c.b16 %v143, %v136
  %v165 = vpack.c.b16 %v151, %v144
  %v166 = vpack.c.b16 %v152, %v145
  %v167 = vpack.c.b16 %v153, %v146
  %v168 = vpack.c.b16 %v154, %v147
  %v169 = vpack.c.b16 %v155, %v148
  %v170 = vpack.c.b16 %v156, %v149
  %v171 = vpack.c.b16 %v157, %v150
  %172 = vrot.lane.b32.xlu0 %v158, 127
  %v173 = vpop.permute.xlu0 %172
  %174 = vrot.lane.b32.xlu0 %v159, 127
  %v175 = vpop.permute.xlu0 %174
  %176 = vrot.lane.b32.xlu0 %v160, 127
  %v177 = vpop.permute.xlu0 %176
  %178 = vrot.lane.b32.xlu0 %v161, 127
  %v179 = vpop.permute.xlu0 %178
  %180 = vrot.lane.b32.xlu0 %v162, 127
  %v181 = vpop.permute.xlu0 %180
  %182 = vrot.lane.b32.xlu0 %v163, 127
  %v183 = vpop.permute.xlu0 %182
  %184 = vrot.lane.b32.xlu0 %v164, 127
  %v185 = vpop.permute.xlu0 %184
  %186 = vrot.lane.b32.xlu0 %v165, 127
  %v187 = vpop.permute.xlu0 %186
  %188 = vrot.lane.b32.xlu0 %v166, 127
  %v189 = vpop.permute.xlu0 %188
  %190 = vrot.lane.b32.xlu0 %v167, 127
  %v191 = vpop.permute.xlu0 %190
  %192 = vrot.lane.b32.xlu0 %v168, 127
  %v193 = vpop.permute.xlu0 %192
  %194 = vrot.lane.b32.xlu0 %v169, 127
  %v195 = vpop.permute.xlu0 %194
  %196 = vrot.lane.b32.xlu0 %v170, 127
  %v197 = vpop.permute.xlu0 %196
  %198 = vrot.lane.b32.xlu0 %v171, 127
  %v199 = vpop.permute.xlu0 %198
  %vm200 = vcmask 1039360
  %v201 = vsel %vm200, %v173, %v175
  %v202 = vsel %vm200, %v175, %v177
  %v203 = vsel %vm200, %v177, %v179
  %v204 = vsel %vm200, %v179, %v181
  %v205 = vsel %vm200, %v181, %v183
  %v206 = vsel %vm200, %v183, %v185
  %v207 = vsel %vm200, %v187, %v189
  %v208 = vsel %vm200, %v189, %v191
  %v209 = vsel %vm200, %v191, %v193
  %v210 = vsel %vm200, %v193, %v195
  %v211 = vsel %vm200, %v195, %v197
  %v212 = vsel %vm200, %v197, %v199
  %225 = vst [vmem:[#allocation2 + $0x60] sm:$0xff] %v201
  %226 = vst [vmem:[#allocation2 + $0x68] sm:$0xff] %v202
  %227 = vst [vmem:[#allocation2 + $0x70] sm:$0xff] %v203
  %228 = vst [vmem:[#allocation2 + $0x78] sm:$0xff] %v204
  %229 = vst [vmem:[#allocation2 + $0x80] sm:$0xff] %v205
  %230 = vst [vmem:[#allocation2 + $0x88] sm:$0xff] %v206
  %231 = vst [vmem:[#allocation2 + $0x90] sm:$0xff] %v207
  %232 = vst [vmem:[#allocation2 + $0x98] sm:$0xff] %v208
  %233 = vst [vmem:[#allocation2 + $0xa0] sm:$0xff] %v209
  %234 = vst [vmem:[#allocation2 + $0xa8] sm:$0xff] %v210
  %235 = vst [vmem:[#allocation2 + $0xb0] sm:$0xff] %v211
  %236 = vst [vmem:[#allocation2 + $0xb8] sm:$0xff] %v212
  %v237 = vld [vmem:[%s0] sm:$0xff]
  %v238 = vld [vmem:[%s0 + $0x8] sm:$0xff]
  %v239 = vld [vmem:[%s0 + $0x10] sm:$0xff]
  %v240 = vld [vmem:[%s0 + $0x18] sm:$0xf]
  %v241 = vld [vmem:[%s0 + $0x1c] sm:$0xff]
  %v242 = vld [vmem:[%s0 + $0x24] sm:$0xff]
  %v243 = vld [vmem:[%s0 + $0x2c] sm:$0xff]
  %v244 = vld [vmem:[%s0 + $0x34] sm:$0xf]
  %v245 = vld [vmem:[%s0 + $0x38] sm:$0xff]
  %v246 = vld [vmem:[%s0 + $0x40] sm:$0xff]
  %v247 = vld [vmem:[%s0 + $0x48] sm:$0xff]
  %v248 = vld [vmem:[%s0 + $0x50] sm:$0xf]
  %v249 = vld [vmem:[%s0 + $0x54] sm:$0xff]
  %v250 = vld [vmem:[%s0 + $0x5c] sm:$0xff]
  %v251 = vld [vmem:[%s0 + $0x64] sm:$0xff]
  %v252 = vld [vmem:[%s0 + $0x6c] sm:$0xf]
  %v269 = vunpack.c.l.b16 %v237
  %v270 = vunpack.c.h.b16 %v237
  %v271 = vunpack.c.l.b16 %v238
  %v272 = vunpack.c.h.b16 %v238
  %v273 = vunpack.c.l.b16 %v239
  %v274 = vunpack.c.h.b16 %v239
  %v275 = vunpack.c.l.b16 %v240
  %v276 = vunpack.c.l.b16 %v241
  %v277 = vunpack.c.h.b16 %v241
  %v278 = vunpack.c.l.b16 %v242
  %v279 = vunpack.c.h.b16 %v242
  %v280 = vunpack.c.l.b16 %v243
  %v281 = vunpack.c.h.b16 %v243
  %v282 = vunpack.c.l.b16 %v244
  %v283 = vunpack.c.l.b16 %v245
  %v284 = vunpack.c.h.b16 %v245
  %v285 = vunpack.c.l.b16 %v246
  %v286 = vunpack.c.h.b16 %v246
  %v287 = vunpack.c.l.b16 %v247
  %v288 = vunpack.c.h.b16 %v247
  %v289 = vunpack.c.l.b16 %v248
  %v290 = vunpack.c.l.b16 %v249
  %v291 = vunpack.c.h.b16 %v249
  %v292 = vunpack.c.l.b16 %v250
  %v293 = vunpack.c.h.b16 %v250
  %v294 = vunpack.c.l.b16 %v251
  %v295 = vunpack.c.h.b16 %v251
  %v296 = vunpack.c.l.b16 %v252
  %v297 = vpack.c.b16 %v276, %v269
  %v298 = vpack.c.b16 %v277, %v270
  %v299 = vpack.c.b16 %v278, %v271
  %v300 = vpack.c.b16 %v279, %v272
  %v301 = vpack.c.b16 %v280, %v273
  %v302 = vpack.c.b16 %v281, %v274
  %v303 = vpack.c.b16 %v282, %v275
  %v304 = vpack.c.b16 %v290, %v283
  %v305 = vpack.c.b16 %v291, %v284
  %v306 = vpack.c.b16 %v292, %v285
  %v307 = vpack.c.b16 %v293, %v286
  %v308 = vpack.c.b16 %v294, %v287
  %v309 = vpack.c.b16 %v295, %v288
  %v310 = vpack.c.b16 %v296, %v289
  %311 = vrot.lane.b32.xlu0 %v297, 126
  %v312 = vpop.permute.xlu0 %311
  %313 = vrot.lane.b32.xlu0 %v298, 126
  %v314 = vpop.permute.xlu0 %313
  %315 = vrot.lane.b32.xlu0 %v299, 126
  %v316 = vpop.permute.xlu0 %315
  %317 = vrot.lane.b32.xlu0 %v300, 126
  %v318 = vpop.permute.xlu0 %317
  %319 = vrot.lane.b32.xlu0 %v301, 126
  %v320 = vpop.permute.xlu0 %319
  %321 = vrot.lane.b32.xlu0 %v302, 126
  %v322 = vpop.permute.xlu0 %321
  %323 = vrot.lane.b32.xlu0 %v303, 126
  %v324 = vpop.permute.xlu0 %323
  %325 = vrot.lane.b32.xlu0 %v304, 126
  %v326 = vpop.permute.xlu0 %325
  %327 = vrot.lane.b32.xlu0 %v305, 126
  %v328 = vpop.permute.xlu0 %327
  %329 = vrot.lane.b32.xlu0 %v306, 126
  %v330 = vpop.permute.xlu0 %329
  %331 = vrot.lane.b32.xlu0 %v307, 126
  %v332 = vpop.permute.xlu0 %331
  %333 = vrot.lane.b32.xlu0 %v308, 126
  %v334 = vpop.permute.xlu0 %333
  %335 = vrot.lane.b32.xlu0 %v309, 126
  %v336 = vpop.permute.xlu0 %335
  %337 = vrot.lane.b32.xlu0 %v310, 126
  %v338 = vpop.permute.xlu0 %337
  %vm339 = vcmask 1031168
  %v340 = vsel %vm339, %v312, %v314
  %v341 = vsel %vm339, %v314, %v316
  %v342 = vsel %vm339, %v316, %v318
  %v343 = vsel %vm339, %v318, %v320
  %v344 = vsel %vm339, %v320, %v322
  %v345 = vsel %vm339, %v322, %v324
  %v346 = vsel %vm339, %v326, %v328
  %v347 = vsel %vm339, %v328, %v330
  %v348 = vsel %vm339, %v330, %v332
  %v349 = vsel %vm339, %v332, %v334
  %v350 = vsel %vm339, %v334, %v336
  %v351 = vsel %vm339, %v336, %v338
  %364 = vst [vmem:[#allocation2 + $0xc0] sm:$0xff] %v340
  %365 = vst [vmem:[#allocation2 + $0xc8] sm:$0xff] %v341
  %366 = vst [vmem:[#allocation2 + $0xd0] sm:$0xff] %v342
  %367 = vst [vmem:[#allocation2 + $0xd8] sm:$0xff] %v343
  %368 = vst [vmem:[#allocation2 + $0xe0] sm:$0xff] %v344
  %369 = vst [vmem:[#allocation2 + $0xe8] sm:$0xff] %v345
  %370 = vst [vmem:[#allocation2 + $0xf0] sm:$0xff] %v346
  %371 = vst [vmem:[#allocation2 + $0xf8] sm:$0xff] %v347
  %372 = vst [vmem:[#allocation2 + $0x100] sm:$0xff] %v348
  %373 = vst [vmem:[#allocation2 + $0x108] sm:$0xff] %v349
  %374 = vst [vmem:[#allocation2 + $0x110] sm:$0xff] %v350
  %375 = vst [vmem:[#allocation2 + $0x118] sm:$0xff] %v351
  %v376 = vld [vmem:[%s0] sm:$0xff]
  %v377 = vld [vmem:[%s0 + $0x8] sm:$0xff]
  %v378 = vld [vmem:[%s0 + $0x10] sm:$0xff]
  %v379 = vld [vmem:[%s0 + $0x18] sm:$0xf]
  %v380 = vld [vmem:[%s0 + $0x1c] sm:$0xff]
  %v381 = vld [vmem:[%s0 + $0x24] sm:$0xff]
  %v382 = vld [vmem:[%s0 + $0x2c] sm:$0xff]
  %v383 = vld [vmem:[%s0 + $0x34] sm:$0xf]
  %v384 = vld [vmem:[%s0 + $0x38] sm:$0xff]
  %v385 = vld [vmem:[%s0 + $0x40] sm:$0xff]
  %v386 = vld [vmem:[%s0 + $0x48] sm:$0xff]
  %v387 = vld [vmem:[%s0 + $0x50] sm:$0xf]
  %v388 = vld [vmem:[%s0 + $0x54] sm:$0xff]
  %v389 = vld [vmem:[%s0 + $0x5c] sm:$0xff]
  %v390 = vld [vmem:[%s0 + $0x64] sm:$0xff]
  %v391 = vld [vmem:[%s0 + $0x6c] sm:$0xf]
  %v408 = vunpack.c.l.b16 %v376
  %v409 = vunpack.c.h.b16 %v376
  %v410 = vunpack.c.l.b16 %v377
  %v411 = vunpack.c.h.b16 %v377
  %v412 = vunpack.c.l.b16 %v378
  %v413 = vunpack.c.h.b16 %v378
  %v414 = vunpack.c.l.b16 %v379
  %v415 = vunpack.c.l.b16 %v380
  %v416 = vunpack.c.h.b16 %v380
  %v417 = vunpack.c.l.b16 %v381
  %v418 = vunpack.c.h.b16 %v381
  %v419 = vunpack.c.l.b16 %v382
  %v420 = vunpack.c.h.b16 %v382
  %v421 = vunpack.c.l.b16 %v383
  %v422 = vunpack.c.l.b16 %v384
  %v423 = vunpack.c.h.b16 %v384
  %v424 = vunpack.c.l.b16 %v385
  %v425 = vunpack.c.h.b16 %v385
  %v426 = vunpack.c.l.b16 %v386
  %v427 = vunpack.c.h.b16 %v386
  %v428 = vunpack.c.l.b16 %v387
  %v429 = vunpack.c.l.b16 %v388
  %v430 = vunpack.c.h.b16 %v388
  %v431 = vunpack.c.l.b16 %v389
  %v432 = vunpack.c.h.b16 %v389
  %v433 = vunpack.c.l.b16 %v390
  %v434 = vunpack.c.h.b16 %v390
  %v435 = vunpack.c.l.b16 %v391
  %v436 = vpack.c.b16 %v415, %v408
  %v437 = vpack.c.b16 %v416, %v409
  %v438 = vpack.c.b16 %v417, %v410
  %v439 = vpack.c.b16 %v418, %v411
  %v440 = vpack.c.b16 %v419, %v412
  %v441 = vpack.c.b16 %v420, %v413
  %v442 = vpack.c.b16 %v421, %v414
  %v443 = vpack.c.b16 %v429, %v422
  %v444 = vpack.c.b16 %v430, %v423
  %v445 = vpack.c.b16 %v431, %v424
  %v446 = vpack.c.b16 %v432, %v425
  %v447 = vpack.c.b16 %v433, %v426
  %v448 = vpack.c.b16 %v434, %v427
  %v449 = vpack.c.b16 %v435, %v428
  %450 = vrot.lane.b32.xlu0 %v436, 110
  %v451 = vpop.permute.xlu0 %450
  %452 = vrot.lane.b32.xlu0 %v437, 110
  %v453 = vpop.permute.xlu0 %452
  %454 = vrot.lane.b32.xlu0 %v438, 110
  %v455 = vpop.permute.xlu0 %454
  %456 = vrot.lane.b32.xlu0 %v439, 110
  %v457 = vpop.permute.xlu0 %456
  %458 = vrot.lane.b32.xlu0 %v440, 110
  %v459 = vpop.permute.xlu0 %458
  %460 = vrot.lane.b32.xlu0 %v441, 110
  %v461 = vpop.permute.xlu0 %460
  %462 = vrot.lane.b32.xlu0 %v442, 110
  %v463 = vpop.permute.xlu0 %462
  %464 = vrot.lane.b32.xlu0 %v443, 110
  %v465 = vpop.permute.xlu0 %464
  %466 = vrot.lane.b32.xlu0 %v444, 110
  %v467 = vpop.permute.xlu0 %466
  %468 = vrot.lane.b32.xlu0 %v445, 110
  %v469 = vpop.permute.xlu0 %468
  %470 = vrot.lane.b32.xlu0 %v446, 110
  %v471 = vpop.permute.xlu0 %470
  %472 = vrot.lane.b32.xlu0 %v447, 110
  %v473 = vpop.permute.xlu0 %472
  %474 = vrot.lane.b32.xlu0 %v448, 110
  %v475 = vpop.permute.xlu0 %474
  %476 = vrot.lane.b32.xlu0 %v449, 110
  %v477 = vpop.permute.xlu0 %476
  %vm478 = vcmask 900096
  %v479 = vsel %vm478, %v451, %v453
  %v480 = vsel %vm478, %v453, %v455
  %v481 = vsel %vm478, %v455, %v457
  %v482 = vsel %vm478, %v457, %v459
  %v483 = vsel %vm478, %v459, %v461
  %v484 = vsel %vm478, %v461, %v463
  %v485 = vsel %vm478, %v465, %v467
  %v486 = vsel %vm478, %v467, %v469
  %v487 = vsel %vm478, %v469, %v471
  %v488 = vsel %vm478, %v471, %v473
  %v489 = vsel %vm478, %v473, %v475
  %v490 = vsel %vm478, %v475, %v477
  %503 = vst [vmem:[#allocation2 + $0x120] sm:$0xff] %v479
  %504 = vst [vmem:[#allocation2 + $0x128] sm:$0xff] %v480
  %505 = vst [vmem:[#allocation2 + $0x130] sm:$0xff] %v481
  %506 = vst [vmem:[#allocation2 + $0x138] sm:$0xff] %v482
  %507 = vst [vmem:[#allocation2 + $0x140] sm:$0xff] %v483
  %508 = vst [vmem:[#allocation2 + $0x148] sm:$0xff] %v484
  %509 = vst [vmem:[#allocation2 + $0x150] sm:$0xff] %v485
  %510 = vst [vmem:[#allocation2 + $0x158] sm:$0xff] %v486
  %511 = vst [vmem:[#allocation2 + $0x160] sm:$0xff] %v487
  %512 = vst [vmem:[#allocation2 + $0x168] sm:$0xff] %v488
  %513 = vst [vmem:[#allocation2 + $0x170] sm:$0xff] %v489
  %514 = vst [vmem:[#allocation2 + $0x178] sm:$0xff] %v490
  %v515 = vld [vmem:[%s0] sm:$0xff]
  %v516 = vld [vmem:[%s0 + $0x8] sm:$0xff]
  %v517 = vld [vmem:[%s0 + $0x10] sm:$0xff]
  %v518 = vld [vmem:[%s0 + $0x18] sm:$0xf]
  %v519 = vld [vmem:[%s0 + $0x1c] sm:$0xff]
  %v520 = vld [vmem:[%s0 + $0x24] sm:$0xff]
  %v521 = vld [vmem:[%s0 + $0x2c] sm:$0xff]
  %v522 = vld [vmem:[%s0 + $0x34] sm:$0xf]
  %v523 = vld [vmem:[%s0 + $0x38] sm:$0xff]
  %v524 = vld [vmem:[%s0 + $0x40] sm:$0xff]
  %v525 = vld [vmem:[%s0 + $0x48] sm:$0xff]
  %v526 = vld [vmem:[%s0 + $0x50] sm:$0xf]
  %v527 = vld [vmem:[%s0 + $0x54] sm:$0xff]
  %v528 = vld [vmem:[%s0 + $0x5c] sm:$0xff]
  %v529 = vld [vmem:[%s0 + $0x64] sm:$0xff]
  %v530 = vld [vmem:[%s0 + $0x6c] sm:$0xf]
  %v547 = vunpack.c.l.b16 %v515
  %v548 = vunpack.c.h.b16 %v515
  %v549 = vunpack.c.l.b16 %v516
  %v550 = vunpack.c.h.b16 %v516
  %v551 = vunpack.c.l.b16 %v517
  %v552 = vunpack.c.h.b16 %v517
  %v553 = vunpack.c.l.b16 %v518
  %v554 = vunpack.c.l.b16 %v519
  %v555 = vunpack.c.h.b16 %v519
  %v556 = vunpack.c.l.b16 %v520
  %v557 = vunpack.c.h.b16 %v520
  %v558 = vunpack.c.l.b16 %v521
  %v559 = vunpack.c.h.b16 %v521
  %v560 = vunpack.c.l.b16 %v522
  %v561 = vunpack.c.l.b16 %v523
  %v562 = vunpack.c.h.b16 %v523
  %v563 = vunpack.c.l.b16 %v524
  %v564 = vunpack.c.h.b16 %v524
  %v565 = vunpack.c.l.b16 %v525
  %v566 = vunpack.c.h.b16 %v525
  %v567 = vunpack.c.l.b16 %v526
  %v568 = vunpack.c.l.b16 %v527
  %v569 = vunpack.c.h.b16 %v527
  %v570 = vunpack.c.l.b16 %v528
  %v571 = vunpack.c.h.b16 %v528
  %v572 = vunpack.c.l.b16 %v529
  %v573 = vunpack.c.h.b16 %v529
  %v574 = vunpack.c.l.b16 %v530
  %v575 = vpack.c.b16 %v554, %v547
  %v576 = vpack.c.b16 %v555, %v548
  %v577 = vpack.c.b16 %v556, %v549
  %v578 = vpack.c.b16 %v557, %v550
  %v579 = vpack.c.b16 %v558, %v551
  %v580 = vpack.c.b16 %v559, %v552
  %v581 = vpack.c.b16 %v560, %v553
  %v582 = vpack.c.b16 %v568, %v561
  %v583 = vpack.c.b16 %v569, %v562
  %v584 = vpack.c.b16 %v570, %v563
  %v585 = vpack.c.b16 %v571, %v564
  %v586 = vpack.c.b16 %v572, %v565
  %v587 = vpack.c.b16 %v573, %v566
  %v588 = vpack.c.b16 %v574, %v567
  %589 = vrot.lane.b32.xlu0 %v575, 109
  %v590 = vpop.permute.xlu0 %589
  %591 = vrot.lane.b32.xlu0 %v576, 109
  %v592 = vpop.permute.xlu0 %591
  %593 = vrot.lane.b32.xlu0 %v577, 109
  %v594 = vpop.permute.xlu0 %593
  %595 = vrot.lane.b32.xlu0 %v578, 109
  %v596 = vpop.permute.xlu0 %595
  %597 = vrot.lane.b32.xlu0 %v579, 109
  %v598 = vpop.permute.xlu0 %597
  %599 = vrot.lane.b32.xlu0 %v580, 109
  %v600 = vpop.permute.xlu0 %599
  %601 = vrot.lane.b32.xlu0 %v581, 109
  %v602 = vpop.permute.xlu0 %601
  %603 = vrot.lane.b32.xlu0 %v582, 109
  %v604 = vpop.permute.xlu0 %603
  %605 = vrot.lane.b32.xlu0 %v583, 109
  %v606 = vpop.permute.xlu0 %605
  %607 = vrot.lane.b32.xlu0 %v584, 109
  %v608 = vpop.permute.xlu0 %607
  %609 = vrot.lane.b32.xlu0 %v585, 109
  %v610 = vpop.permute.xlu0 %609
  %611 = vrot.lane.b32.xlu0 %v586, 109
  %v612 = vpop.permute.xlu0 %611
  %613 = vrot.lane.b32.xlu0 %v587, 109
  %v614 = vpop.permute.xlu0 %613
  %615 = vrot.lane.b32.xlu0 %v588, 109
  %v616 = vpop.permute.xlu0 %615
  %vm617 = vcmask 891904
  %v618 = vsel %vm617, %v590, %v592
  %v619 = vsel %vm617, %v592, %v594
  %v620 = vsel %vm617, %v594, %v596
  %v621 = vsel %vm617, %v596, %v598
  %v622 = vsel %vm617, %v598, %v600
  %v623 = vsel %vm617, %v600, %v602
  %v624 = vsel %vm617, %v604, %v606
  %v625 = vsel %vm617, %v606, %v608
  %v626 = vsel %vm617, %v608, %v610
  %v627 = vsel %vm617, %v610, %v612
  %v628 = vsel %vm617, %v612, %v614
  %v629 = vsel %vm617, %v614, %v616
  %642 = vst [vmem:[#allocation2 + $0x180] sm:$0xff] %v618
  %643 = vst [vmem:[#allocation2 + $0x188] sm:$0xff] %v619
  %644 = vst [vmem:[#allocation2 + $0x190] sm:$0xff] %v620
  %645 = vst [vmem:[#allocation2 + $0x198] sm:$0xff] %v621
  %646 = vst [vmem:[#allocation2 + $0x1a0] sm:$0xff] %v622
  %647 = vst [vmem:[#allocation2 + $0x1a8] sm:$0xff] %v623
  %648 = vst [vmem:[#allocation2 + $0x1b0] sm:$0xff] %v624
  %649 = vst [vmem:[#allocation2 + $0x1b8] sm:$0xff] %v625
  %650 = vst [vmem:[#allocation2 + $0x1c0] sm:$0xff] %v626
  %651 = vst [vmem:[#allocation2 + $0x1c8] sm:$0xff] %v627
  %652 = vst [vmem:[#allocation2 + $0x1d0] sm:$0xff] %v628
  %653 = vst [vmem:[#allocation2 + $0x1d8] sm:$0xff] %v629
  %v654 = vld [vmem:[%s0] sm:$0xff]
  %v655 = vld [vmem:[%s0 + $0x8] sm:$0xff]
  %v656 = vld [vmem:[%s0 + $0x10] sm:$0xff]
  %v657 = vld [vmem:[%s0 + $0x18] sm:$0xf]
  %v658 = vld [vmem:[%s0 + $0x1c] sm:$0xff]
  %v659 = vld [vmem:[%s0 + $0x24] sm:$0xff]
  %v660 = vld [vmem:[%s0 + $0x2c] sm:$0xff]
  %v661 = vld [vmem:[%s0 + $0x34] sm:$0xf]
  %v662 = vld [vmem:[%s0 + $0x38] sm:$0xff]
  %v663 = vld [vmem:[%s0 + $0x40] sm:$0xff]
  %v664 = vld [vmem:[%s0 + $0x48] sm:$0xff]
  %v665 = vld [vmem:[%s0 + $0x50] sm:$0xf]
  %v666 = vld [vmem:[%s0 + $0x54] sm:$0xff]
  %v667 = vld [vmem:[%s0 + $0x5c] sm:$0xff]
  %v668 = vld [vmem:[%s0 + $0x64] sm:$0xff]
  %v669 = vld [vmem:[%s0 + $0x6c] sm:$0xf]
  %v686 = vunpack.c.l.b16 %v654
  %v687 = vunpack.c.h.b16 %v654
  %v688 = vunpack.c.l.b16 %v655
  %v689 = vunpack.c.h.b16 %v655
  %v690 = vunpack.c.l.b16 %v656
  %v691 = vunpack.c.h.b16 %v656
  %v692 = vunpack.c.l.b16 %v657
  %v693 = vunpack.c.l.b16 %v658
  %v694 = vunpack.c.h.b16 %v658
  %v695 = vunpack.c.l.b16 %v659
  %v696 = vunpack.c.h.b16 %v659
  %v697 = vunpack.c.l.b16 %v660
  %v698 = vunpack.c.h.b16 %v660
  %v699 = vunpack.c.l.b16 %v661
  %v700 = vunpack.c.l.b16 %v662
  %v701 = vunpack.c.h.b16 %v662
  %v702 = vunpack.c.l.b16 %v663
  %v703 = vunpack.c.h.b16 %v663
  %v704 = vunpack.c.l.b16 %v664
  %v705 = vunpack.c.h.b16 %v664
  %v706 = vunpack.c.l.b16 %v665
  %v707 = vunpack.c.l.b16 %v666
  %v708 = vunpack.c.h.b16 %v666
  %v709 = vunpack.c.l.b16 %v667
  %v710 = vunpack.c.h.b16 %v667
  %v711 = vunpack.c.l.b16 %v668
  %v712 = vunpack.c.h.b16 %v668
  %v713 = vunpack.c.l.b16 %v669
  %v714 = vpack.c.b16 %v693, %v686
  %v715 = vpack.c.b16 %v694, %v687
  %v716 = vpack.c.b16 %v695, %v688
  %v717 = vpack.c.b16 %v696, %v689
  %v718 = vpack.c.b16 %v697, %v690
  %v719 = vpack.c.b16 %v698, %v691
  %v720 = vpack.c.b16 %v699, %v692
  %v721 = vpack.c.b16 %v707, %v700
  %v722 = vpack.c.b16 %v708, %v701
  %v723 = vpack.c.b16 %v709, %v702
  %v724 = vpack.c.b16 %v710, %v703
  %v725 = vpack.c.b16 %v711, %v704
  %v726 = vpack.c.b16 %v712, %v705
  %v727 = vpack.c.b16 %v713, %v706
  %728 = vrot.lane.b32.xlu0 %v714, 108
  %v729 = vpop.permute.xlu0 %728
  %730 = vrot.lane.b32.xlu0 %v715, 108
  %v731 = vpop.permute.xlu0 %730
  %732 = vrot.lane.b32.xlu0 %v716, 108
  %v733 = vpop.permute.xlu0 %732
  %734 = vrot.lane.b32.xlu0 %v717, 108
  %v735 = vpop.permute.xlu0 %734
  %736 = vrot.lane.b32.xlu0 %v718, 108
  %v737 = vpop.permute.xlu0 %736
  %738 = vrot.lane.b32.xlu0 %v719, 108
  %v739 = vpop.permute.xlu0 %738
  %740 = vrot.lane.b32.xlu0 %v720, 108
  %v741 = vpop.permute.xlu0 %740
  %742 = vrot.lane.b32.xlu0 %v721, 108
  %v743 = vpop.permute.xlu0 %742
  %744 = vrot.lane.b32.xlu0 %v722, 108
  %v745 = vpop.permute.xlu0 %744
  %746 = vrot.lane.b32.xlu0 %v723, 108
  %v747 = vpop.permute.xlu0 %746
  %748 = vrot.lane.b32.xlu0 %v724, 108
  %v749 = vpop.permute.xlu0 %748
  %750 = vrot.lane.b32.xlu0 %v725, 108
  %v751 = vpop.permute.xlu0 %750
  %752 = vrot.lane.b32.xlu0 %v726, 108
  %v753 = vpop.permute.xlu0 %752
  %754 = vrot.lane.b32.xlu0 %v727, 108
  %v755 = vpop.permute.xlu0 %754
  %vm756 = vcmask 883712
  %v757 = vsel %vm756, %v729, %v731
  %v758 = vsel %vm756, %v731, %v733
  %v759 = vsel %vm756, %v733, %v735
  %v760 = vsel %vm756, %v735, %v737
  %v761 = vsel %vm756, %v737, %v739
  %v762 = vsel %vm756, %v739, %v741
  %v763 = vsel %vm756, %v743, %v745
  %v764 = vsel %vm756, %v745, %v747
  %v765 = vsel %vm756, %v747, %v749
  %v766 = vsel %vm756, %v749, %v751
  %v767 = vsel %vm756, %v751, %v753
  %v768 = vsel %vm756, %v753, %v755
  %781 = vst [vmem:[#allocation2 + $0x1e0] sm:$0xff] %v757
  %782 = vst [vmem:[#allocation2 + $0x1e8] sm:$0xff] %v758
  %783 = vst [vmem:[#allocation2 + $0x1f0] sm:$0xff] %v759
  %784 = vst [vmem:[#allocation2 + $0x1f8] sm:$0xff] %v760
  %785 = vst [vmem:[#allocation2 + $0x200] sm:$0xff] %v761
  %786 = vst [vmem:[#allocation2 + $0x208] sm:$0xff] %v762
  %787 = vst [vmem:[#allocation2 + $0x210] sm:$0xff] %v763
  %788 = vst [vmem:[#allocation2 + $0x218] sm:$0xff] %v764
  %789 = vst [vmem:[#allocation2 + $0x220] sm:$0xff] %v765
  %790 = vst [vmem:[#allocation2 + $0x228] sm:$0xff] %v766
  %791 = vst [vmem:[#allocation2 + $0x230] sm:$0xff] %v767
  %792 = vst [vmem:[#allocation2 + $0x238] sm:$0xff] %v768
  %v793 = vld [vmem:[%s0] sm:$0xff]
  %v794 = vld [vmem:[%s0 + $0x8] sm:$0xff]
  %v795 = vld [vmem:[%s0 + $0x10] sm:$0xff]
  %v796 = vld [vmem:[%s0 + $0x18] sm:$0xf]
  %v797 = vld [vmem:[%s0 + $0x1c] sm:$0xff]
  %v798 = vld [vmem:[%s0 + $0x24] sm:$0xff]
  %v799 = vld [vmem:[%s0 + $0x2c] sm:$0xff]
  %v800 = vld [vmem:[%s0 + $0x34] sm:$0xf]
  %v801 = vld [vmem:[%s0 + $0x38] sm:$0xff]
  %v802 = vld [vmem:[%s0 + $0x40] sm:$0xff]
  %v803 = vld [vmem:[%s0 + $0x48] sm:$0xff]
  %v804 = vld [vmem:[%s0 + $0x50] sm:$0xf]
  %v805 = vld [vmem:[%s0 + $0x54] sm:$0xff]
  %v806 = vld [vmem:[%s0 + $0x5c] sm:$0xff]
  %v807 = vld [vmem:[%s0 + $0x64] sm:$0xff]
  %v808 = vld [vmem:[%s0 + $0x6c] sm:$0xf]
  %v825 = vunpack.c.l.b16 %v793
  %v826 = vunpack.c.h.b16 %v793
  %v827 = vunpack.c.l.b16 %v794
  %v828 = vunpack.c.h.b16 %v794
  %v829 = vunpack.c.l.b16 %v795
  %v830 = vunpack.c.h.b16 %v795
  %v831 = vunpack.c.l.b16 %v796
  %v832 = vunpack.c.l.b16 %v797
  %v833 = vunpack.c.h.b16 %v797
  %v834 = vunpack.c.l.b16 %v798
  %v835 = vunpack.c.h.b16 %v798
  %v836 = vunpack.c.l.b16 %v799
  %v837 = vunpack.c.h.b16 %v799
  %v838 = vunpack.c.l.b16 %v800
  %v839 = vunpack.c.l.b16 %v801
  %v840 = vunpack.c.h.b16 %v801
  %v841 = vunpack.c.l.b16 %v802
  %v842 = vunpack.c.h.b16 %v802
  %v843 = vunpack.c.l.b16 %v803
  %v844 = vunpack.c.h.b16 %v803
  %v845 = vunpack.c.l.b16 %v804
  %v846 = vunpack.c.l.b16 %v805
  %v847 = vunpack.c.h.b16 %v805
  %v848 = vunpack.c.l.b16 %v806
  %v849 = vunpack.c.h.b16 %v806
  %v850 = vunpack.c.l.b16 %v807
  %v851 = vunpack.c.h.b16 %v807
  %v852 = vunpack.c.l.b16 %v808
  %v853 = vpack.c.b16 %v832, %v825
  %v854 = vpack.c.b16 %v833, %v826
  %v855 = vpack.c.b16 %v834, %v827
  %v856 = vpack.c.b16 %v835, %v828
  %v857 = vpack.c.b16 %v836, %v829
  %v858 = vpack.c.b16 %v837, %v830
  %v859 = vpack.c.b16 %v838, %v831
  %v860 = vpack.c.b16 %v846, %v839
  %v861 = vpack.c.b16 %v847, %v840
  %v862 = vpack.c.b16 %v848, %v841
  %v863 = vpack.c.b16 %v849, %v842
  %v864 = vpack.c.b16 %v850, %v843
  %v865 = vpack.c.b16 %v851, %v844
  %v866 = vpack.c.b16 %v852, %v845
  %867 = vrot.lane.b32.xlu0 %v853, 92
  %v868 = vpop.permute.xlu0 %867
  %869 = vrot.lane.b32.xlu0 %v854, 92
  %v870 = vpop.permute.xlu0 %869
  %871 = vrot.lane.b32.xlu0 %v855, 92
  %v872 = vpop.permute.xlu0 %871
  %873 = vrot.lane.b32.xlu0 %v856, 92
  %v874 = vpop.permute.xlu0 %873
  %875 = vrot.lane.b32.xlu0 %v857, 92
  %v876 = vpop.permute.xlu0 %875
  %877 = vrot.lane.b32.xlu0 %v858, 92
  %v878 = vpop.permute.xlu0 %877
  %879 = vrot.lane.b32.xlu0 %v859, 92
  %v880 = vpop.permute.xlu0 %879
  %881 = vrot.lane.b32.xlu0 %v860, 92
  %v882 = vpop.permute.xlu0 %881
  %883 = vrot.lane.b32.xlu0 %v861, 92
  %v884 = vpop.permute.xlu0 %883
  %885 = vrot.lane.b32.xlu0 %v862, 92
  %v886 = vpop.permute.xlu0 %885
  %887 = vrot.lane.b32.xlu0 %v863, 92
  %v888 = vpop.permute.xlu0 %887
  %889 = vrot.lane.b32.xlu0 %v864, 92
  %v890 = vpop.permute.xlu0 %889
  %891 = vrot.lane.b32.xlu0 %v865, 92
  %v892 = vpop.permute.xlu0 %891
  %893 = vrot.lane.b32.xlu0 %v866, 92
  %v894 = vpop.permute.xlu0 %893
  %vm895 = vcmask 752640
  %v896 = vsel %vm895, %v868, %v870
  %v897 = vsel %vm895, %v870, %v872
  %v898 = vsel %vm895, %v872, %v874
  %v899 = vsel %vm895, %v874, %v876
  %v900 = vsel %vm895, %v876, %v878
  %v901 = vsel %vm895, %v878, %v880
  %v902 = vsel %vm895, %v882, %v884
  %v903 = vsel %vm895, %v884, %v886
  %v904 = vsel %vm895, %v886, %v888
  %v905 = vsel %vm895, %v888, %v890
  %v906 = vsel %vm895, %v890, %v892
  %v907 = vsel %vm895, %v892, %v894
  %920 = vst [vmem:[#allocation2 + $0x240] sm:$0xff] %v896
  %921 = vst [vmem:[#allocation2 + $0x248] sm:$0xff] %v897
  %922 = vst [vmem:[#allocation2 + $0x250] sm:$0xff] %v898
  %923 = vst [vmem:[#allocation2 + $0x258] sm:$0xff] %v899
  %924 = vst [vmem:[#allocation2 + $0x260] sm:$0xff] %v900
  %925 = vst [vmem:[#allocation2 + $0x268] sm:$0xff] %v901
  %926 = vst [vmem:[#allocation2 + $0x270] sm:$0xff] %v902
  %927 = vst [vmem:[#allocation2 + $0x278] sm:$0xff] %v903
  %928 = vst [vmem:[#allocation2 + $0x280] sm:$0xff] %v904
  %929 = vst [vmem:[#allocation2 + $0x288] sm:$0xff] %v905
  %930 = vst [vmem:[#allocation2 + $0x290] sm:$0xff] %v906
  %931 = vst [vmem:[#allocation2 + $0x298] sm:$0xff] %v907
  %v932 = vld [vmem:[%s0] sm:$0xff]
  %v933 = vld [vmem:[%s0 + $0x8] sm:$0xff]
  %v934 = vld [vmem:[%s0 + $0x10] sm:$0xff]
  %v935 = vld [vmem:[%s0 + $0x18] sm:$0xf]
  %v936 = vld [vmem:[%s0 + $0x1c] sm:$0xff]
  %v937 = vld [vmem:[%s0 + $0x24] sm:$0xff]
  %v938 = vld [vmem:[%s0 + $0x2c] sm:$0xff]
  %v939 = vld [vmem:[%s0 + $0x34] sm:$0xf]
  %v940 = vld [vmem:[%s0 + $0x38] sm:$0xff]
  %v941 = vld [vmem:[%s0 + $0x40] sm:$0xff]
  %v942 = vld [vmem:[%s0 + $0x48] sm:$0xff]
  %v943 = vld [vmem:[%s0 + $0x50] sm:$0xf]
  %v944 = vld [vmem:[%s0 + $0x54] sm:$0xff]
  %v945 = vld [vmem:[%s0 + $0x5c] sm:$0xff]
  %v946 = vld [vmem:[%s0 + $0x64] sm:$0xff]
  %v947 = vld [vmem:[%s0 + $0x6c] sm:$0xf]
  %v964 = vunpack.c.l.b16 %v932
  %v965 = vunpack.c.h.b16 %v932
  %v966 = vunpack.c.l.b16 %v933
  %v967 = vunpack.c.h.b16 %v933
  %v968 = vunpack.c.l.b16 %v934
  %v969 = vunpack.c.h.b16 %v934
  %v970 = vunpack.c.l.b16 %v935
  %v971 = vunpack.c.l.b16 %v936
  %v972 = vunpack.c.h.b16 %v936
  %v973 = vunpack.c.l.b16 %v937
  %v974 = vunpack.c.h.b16 %v937
  %v975 = vunpack.c.l.b16 %v938
  %v976 = vunpack.c.h.b16 %v938
  %v977 = vunpack.c.l.b16 %v939
  %v978 = vunpack.c.l.b16 %v940
  %v979 = vunpack.c.h.b16 %v940
  %v980 = vunpack.c.l.b16 %v941
  %v981 = vunpack.c.h.b16 %v941
  %v982 = vunpack.c.l.b16 %v942
  %v983 = vunpack.c.h.b16 %v942
  %v984 = vunpack.c.l.b16 %v943
  %v985 = vunpack.c.l.b16 %v944
  %v986 = vunpack.c.h.b16 %v944
  %v987 = vunpack.c.l.b16 %v945
  %v988 = vunpack.c.h.b16 %v945
  %v989 = vunpack.c.l.b16 %v946
  %v990 = vunpack.c.h.b16 %v946
  %v991 = vunpack.c.l.b16 %v947
  %v992 = vpack.c.b16 %v971, %v964
  %v993 = vpack.c.b16 %v972, %v965
  %v994 = vpack.c.b16 %v973, %v966
  %v995 = vpack.c.b16 %v974, %v967
  %v996 = vpack.c.b16 %v975, %v968
  %v997 = vpack.c.b16 %v976, %v969
  %v998 = vpack.c.b16 %v977, %v970
  %v999 = vpack.c.b16 %v985, %v978
  %v1000 = vpack.c.b16 %v986, %v979
  %v1001 = vpack.c.b16 %v987, %v980
  %v1002 = vpack.c.b16 %v988, %v981
  %v1003 = vpack.c.b16 %v989, %v982
  %v1004 = vpack.c.b16 %v990, %v983
  %v1005 = vpack.c.b16 %v991, %v984
  %1006 = vrot.lane.b32.xlu0 %v992, 91
  %v1007 = vpop.permute.xlu0 %1006
  %1008 = vrot.lane.b32.xlu0 %v993, 91
  %v1009 = vpop.permute.xlu0 %1008
  %1010 = vrot.lane.b32.xlu0 %v994, 91
  %v1011 = vpop.permute.xlu0 %1010
  %1012 = vrot.lane.b32.xlu0 %v995, 91
  %v1013 = vpop.permute.xlu0 %1012
  %1014 = vrot.lane.b32.xlu0 %v996, 91
  %v1015 = vpop.permute.xlu0 %1014
  %1016 = vrot.lane.b32.xlu0 %v997, 91
  %v1017 = vpop.permute.xlu0 %1016
  %1018 = vrot.lane.b32.xlu0 %v998, 91
  %v1019 = vpop.permute.xlu0 %1018
  %1020 = vrot.lane.b32.xlu0 %v999, 91
  %v1021 = vpop.permute.xlu0 %1020
  %1022 = vrot.lane.b32.xlu0 %v1000, 91
  %v1023 = vpop.permute.xlu0 %1022
  %1024 = vrot.lane.b32.xlu0 %v1001, 91
  %v1025 = vpop.permute.xlu0 %1024
  %1026 = vrot.lane.b32.xlu0 %v1002, 91
  %v1027 = vpop.permute.xlu0 %1026
  %1028 = vrot.lane.b32.xlu0 %v1003, 91
  %v1029 = vpop.permute.xlu0 %1028
  %1030 = vrot.lane.b32.xlu0 %v1004, 91
  %v1031 = vpop.permute.xlu0 %1030
  %1032 = vrot.lane.b32.xlu0 %v1005, 91
  %v1033 = vpop.permute.xlu0 %1032
  %vm1034 = vcmask 744448
  %v1035 = vsel %vm1034, %v1007, %v1009
  %v1036 = vsel %vm1034, %v1009, %v1011
  %v1037 = vsel %vm1034, %v1011, %v1013
  %v1038 = vsel %vm1034, %v1013, %v1015
  %v1039 = vsel %vm1034, %v1015, %v1017
  %v1040 = vsel %vm1034, %v1017, %v1019
  %v1041 = vsel %vm1034, %v1021, %v1023
  %v1042 = vsel %vm1034, %v1023, %v1025
  %v1043 = vsel %vm1034, %v1025, %v1027
  %v1044 = vsel %vm1034, %v1027, %v1029
  %v1045 = vsel %vm1034, %v1029, %v1031
  %v1046 = vsel %vm1034, %v1031, %v1033
  %1059 = vst [vmem:[#allocation2 + $0x2a0] sm:$0xff] %v1035
  %1060 = vst [vmem:[#allocation2 + $0x2a8] sm:$0xff] %v1036
  %1061 = vst [vmem:[#allocation2 + $0x2b0] sm:$0xff] %v1037
  %1062 = vst [vmem:[#allocation2 + $0x2b8] sm:$0xff] %v1038
  %1063 = vst [vmem:[#allocation2 + $0x2c0] sm:$0xff] %v1039
  %1064 = vst [vmem:[#allocation2 + $0x2c8] sm:$0xff] %v1040
  %1065 = vst [vmem:[#allocation2 + $0x2d0] sm:$0xff] %v1041
  %1066 = vst [vmem:[#allocation2 + $0x2d8] sm:$0xff] %v1042
  %1067 = vst [vmem:[#allocation2 + $0x2e0] sm:$0xff] %v1043
  %1068 = vst [vmem:[#allocation2 + $0x2e8] sm:$0xff] %v1044
  %1069 = vst [vmem:[#allocation2 + $0x2f0] sm:$0xff] %v1045
  %1070 = vst [vmem:[#allocation2 + $0x2f8] sm:$0xff] %v1046
  %v1071 = vld [vmem:[%s0] sm:$0xff]
  %v1072 = vld [vmem:[%s0 + $0x8] sm:$0xff]
  %v1073 = vld [vmem:[%s0 + $0x10] sm:$0xff]
  %v1074 = vld [vmem:[%s0 + $0x18] sm:$0xf]
  %v1075 = vld [vmem:[%s0 + $0x1c] sm:$0xff]
  %v1076 = vld [vmem:[%s0 + $0x24] sm:$0xff]
  %v1077 = vld [vmem:[%s0 + $0x2c] sm:$0xff]
  %v1078 = vld [vmem:[%s0 + $0x34] sm:$0xf]
  %v1079 = vld [vmem:[%s0 + $0x38] sm:$0xff]
  %v1080 = vld [vmem:[%s0 + $0x40] sm:$0xff]
  %v1081 = vld [vmem:[%s0 + $0x48] sm:$0xff]
  %v1082 = vld [vmem:[%s0 + $0x50] sm:$0xf]
  %v1083 = vld [vmem:[%s0 + $0x54] sm:$0xff]
  %v1084 = vld [vmem:[%s0 + $0x5c] sm:$0xff]
  %v1085 = vld [vmem:[%s0 + $0x64] sm:$0xff]
  %v1086 = vld [vmem:[%s0 + $0x6c] sm:$0xf]
  %v1103 = vunpack.c.l.b16 %v1071
  %v1104 = vunpack.c.h.b16 %v1071
  %v1105 = vunpack.c.l.b16 %v1072
  %v1106 = vunpack.c.h.b16 %v1072
  %v1107 = vunpack.c.l.b16 %v1073
  %v1108 = vunpack.c.h.b16 %v1073
  %v1109 = vunpack.c.l.b16 %v1074
  %v1110 = vunpack.c.l.b16 %v1075
  %v1111 = vunpack.c.h.b16 %v1075
  %v1112 = vunpack.c.l.b16 %v1076
  %v1113 = vunpack.c.h.b16 %v1076
  %v1114 = vunpack.c.l.b16 %v1077
  %v1115 = vunpack.c.h.b16 %v1077
  %v1116 = vunpack.c.l.b16 %v1078
  %v1117 = vunpack.c.l.b16 %v1079
  %v1118 = vunpack.c.h.b16 %v1079
  %v1119 = vunpack.c.l.b16 %v1080
  %v1120 = vunpack.c.h.b16 %v1080
  %v1121 = vunpack.c.l.b16 %v1081
  %v1122 = vunpack.c.h.b16 %v1081
  %v1123 = vunpack.c.l.b16 %v1082
  %v1124 = vunpack.c.l.b16 %v1083
  %v1125 = vunpack.c.h.b16 %v1083
  %v1126 = vunpack.c.l.b16 %v1084
  %v1127 = vunpack.c.h.b16 %v1084
  %v1128 = vunpack.c.l.b16 %v1085
  %v1129 = vunpack.c.h.b16 %v1085
  %v1130 = vunpack.c.l.b16 %v1086
  %v1131 = vpack.c.b16 %v1110, %v1103
  %v1132 = vpack.c.b16 %v1111, %v1104
  %v1133 = vpack.c.b16 %v1112, %v1105
  %v1134 = vpack.c.b16 %v1113, %v1106
  %v1135 = vpack.c.b16 %v1114, %v1107
  %v1136 = vpack.c.b16 %v1115, %v1108
  %v1137 = vpack.c.b16 %v1116, %v1109
  %v1138 = vpack.c.b16 %v1124, %v1117
  %v1139 = vpack.c.b16 %v1125, %v1118
  %v1140 = vpack.c.b16 %v1126, %v1119
  %v1141 = vpack.c.b16 %v1127, %v1120
  %v1142 = vpack.c.b16 %v1128, %v1121
  %v1143 = vpack.c.b16 %v1129, %v1122
  %v1144 = vpack.c.b16 %v1130, %v1123
  %1145 = vrot.lane.b32.xlu0 %v1131, 90
  %v1146 = vpop.permute.xlu0 %1145
  %1147 = vrot.lane.b32.xlu0 %v1132, 90
  %v1148 = vpop.permute.xlu0 %1147
  %1149 = vrot.lane.b32.xlu0 %v1133, 90
  %v1150 = vpop.permute.xlu0 %1149
  %1151 = vrot.lane.b32.xlu0 %v1134, 90
  %v1152 = vpop.permute.xlu0 %1151
  %1153 = vrot.lane.b32.xlu0 %v1135, 90
  %v1154 = vpop.permute.xlu0 %1153
  %1155 = vrot.lane.b32.xlu0 %v1136, 90
  %v1156 = vpop.permute.xlu0 %1155
  %1157 = vrot.lane.b32.xlu0 %v1137, 90
  %v1158 = vpop.permute.xlu0 %1157
  %1159 = vrot.lane.b32.xlu0 %v1138, 90
  %v1160 = vpop.permute.xlu0 %1159
  %1161 = vrot.lane.b32.xlu0 %v1139, 90
  %v1162 = vpop.permute.xlu0 %1161
  %1163 = vrot.lane.b32.xlu0 %v1140, 90
  %v1164 = vpop.permute.xlu0 %1163
  %1165 = vrot.lane.b32.xlu0 %v1141, 90
  %v1166 = vpop.permute.xlu0 %1165
  %1167 = vrot.lane.b32.xlu0 %v1142, 90
  %v1168 = vpop.permute.xlu0 %1167
  %1169 = vrot.lane.b32.xlu0 %v1143, 90
  %v1170 = vpop.permute.xlu0 %1169
  %1171 = vrot.lane.b32.xlu0 %v1144, 90
  %v1172 = vpop.permute.xlu0 %1171
  %vm1173 = vcmask 736256
  %v1174 = vsel %vm1173, %v1146, %v1148
  %v1175 = vsel %vm1173, %v1148, %v1150
  %v1176 = vsel %vm1173, %v1150, %v1152
  %v1177 = vsel %vm1173, %v1152, %v1154
  %v1178 = vsel %vm1173, %v1154, %v1156
  %v1179 = vsel %vm1173, %v1156, %v1158
  %v1180 = vsel %vm1173, %v1160, %v1162
  %v1181 = vsel %vm1173, %v1162, %v1164
  %v1182 = vsel %vm1173, %v1164, %v1166
  %v1183 = vsel %vm1173, %v1166, %v1168
  %v1184 = vsel %vm1173, %v1168, %v1170
  %v1185 = vsel %vm1173, %v1170, %v1172
  %1198 = vst [vmem:[#allocation2 + $0x300] sm:$0xff] %v1174
  %1199 = vst [vmem:[#allocation2 + $0x308] sm:$0xff] %v1175
  %1200 = vst [vmem:[#allocation2 + $0x310] sm:$0xff] %v1176
  %1201 = vst [vmem:[#allocation2 + $0x318] sm:$0xff] %v1177
  %1202 = vst [vmem:[#allocation2 + $0x320] sm:$0xff] %v1178
  %1203 = vst [vmem:[#allocation2 + $0x328] sm:$0xff] %v1179
  %1204 = vst [vmem:[#allocation2 + $0x330] sm:$0xff] %v1180
  %1205 = vst [vmem:[#allocation2 + $0x338] sm:$0xff] %v1181
  %1206 = vst [vmem:[#allocation2 + $0x340] sm:$0xff] %v1182
  %1207 = vst [vmem:[#allocation2 + $0x348] sm:$0xff] %v1183
  %1208 = vst [vmem:[#allocation2 + $0x350] sm:$0xff] %v1184
  %1209 = vst [vmem:[#allocation2 + $0x358] sm:$0xff] %v1185
  %v1210 = vld [vmem:[%s1] sm:$0xff]
  %v1211 = vld [vmem:[%s1 + $0x8] sm:$0xf]
  %v1212 = vld [vmem:[%s1 + $0xc] sm:$0x33]
  %v1213 = vld [vmem:[%s1 + $0x14] sm:$0x3]
  %v1214 = vld [vmem:[#allocation2] sm:$0xff]
  %v1215 = vld [vmem:[#allocation2 + $0x8] sm:$0xff]
  %v1216 = vld [vmem:[#allocation2 + $0x10] sm:$0xff]
  %v1217 = vld [vmem:[#allocation2 + $0x18] sm:$0xff]
  %v1218 = vld [vmem:[#allocation2 + $0x20] sm:$0xff]
  %v1219 = vld [vmem:[#allocation2 + $0x28] sm:$0xff]
  %v1220 = vld [vmem:[#allocation2 + $0x30] sm:$0xff]
  %v1221 = vld [vmem:[#allocation2 + $0x38] sm:$0xff]
  %v1222 = vld [vmem:[#allocation2 + $0x40] sm:$0xff]
  %v1223 = vld [vmem:[#allocation2 + $0x48] sm:$0xff]
  %v1224 = vld [vmem:[#allocation2 + $0x50] sm:$0xff]
  %v1225 = vld [vmem:[#allocation2 + $0x58] sm:$0xff]
  %v1226 = vld [vmem:[#allocation2 + $0x60] sm:$0xff]
  %v1227 = vld [vmem:[#allocation2 + $0x68] sm:$0xff]
  %v1228 = vld [vmem:[#allocation2 + $0x70] sm:$0xff]
  %v1229 = vld [vmem:[#allocation2 + $0x78] sm:$0xff]
  %v1230 = vld [vmem:[#allocation2 + $0x80] sm:$0xff]
  %v1231 = vld [vmem:[#allocation2 + $0x88] sm:$0xff]
  %v1232 = vld [vmem:[#allocation2 + $0x90] sm:$0xff]
  %v1233 = vld [vmem:[#allocation2 + $0x98] sm:$0xff]
  %v1234 = vld [vmem:[#allocation2 + $0xa0] sm:$0xff]
  %v1235 = vld [vmem:[#allocation2 + $0xa8] sm:$0xff]
  %v1236 = vld [vmem:[#allocation2 + $0xb0] sm:$0xff]
  %v1237 = vld [vmem:[#allocation2 + $0xb8] sm:$0xff]
  %v1238 = vld [vmem:[#allocation2 + $0xc0] sm:$0xff]
  %v1239 = vld [vmem:[#allocation2 + $0xc8] sm:$0xff]
  %v1240 = vld [vmem:[#allocation2 + $0xd0] sm:$0xff]
  %v1241 = vld [vmem:[#allocation2 + $0xd8] sm:$0xff]
  %v1242 = vld [vmem:[#allocation2 + $0xe0] sm:$0xff]
  %v1243 = vld [vmem:[#allocation2 + $0xe8] sm:$0xff]
  %v1244 = vld [vmem:[#allocation2 + $0xf0] sm:$0xff]
  %v1245 = vld [vmem:[#allocation2 + $0xf8] sm:$0xff]
  %v1246 = vld [vmem:[#allocation2 + $0x100] sm:$0xff]
  %v1247 = vld [vmem:[#allocation2 + $0x108] sm:$0xff]
  %v1248 = vld [vmem:[#allocation2 + $0x110] sm:$0xff]
  %v1249 = vld [vmem:[#allocation2 + $0x118] sm:$0xff]
  %v1250 = vld [vmem:[#allocation2 + $0x120] sm:$0xff]
  %v1251 = vld [vmem:[#allocation2 + $0x128] sm:$0xff]
  %v1252 = vld [vmem:[#allocation2 + $0x130] sm:$0xff]
  %v1253 = vld [vmem:[#allocation2 + $0x138] sm:$0xff]
  %v1254 = vld [vmem:[#allocation2 + $0x140] sm:$0xff]
  %v1255 = vld [vmem:[#allocation2 + $0x148] sm:$0xff]
  %v1256 = vld [vmem:[#allocation2 + $0x150] sm:$0xff]
  %v1257 = vld [vmem:[#allocation2 + $0x158] sm:$0xff]
  %v1258 = vld [vmem:[#allocation2 + $0x160] sm:$0xff]
  %v1259 = vld [vmem:[#allocation2 + $0x168] sm:$0xff]
  %v1260 = vld [vmem:[#allocation2 + $0x170] sm:$0xff]
  %v1261 = vld [vmem:[#allocation2 + $0x178] sm:$0xff]
  %v1262 = vld [vmem:[#allocation2 + $0x180] sm:$0xff]
  %v1263 = vld [vmem:[#allocation2 + $0x188] sm:$0xff]
  %v1264 = vld [vmem:[#allocation2 + $0x190] sm:$0xff]
  %v1265 = vld [vmem:[#allocation2 + $0x198] sm:$0xff]
  %v1266 = vld [vmem:[#allocation2 + $0x1a0] sm:$0xff]
  %v1267 = vld [vmem:[#allocation2 + $0x1a8] sm:$0xff]
  %v1268 = vld [vmem:[#allocation2 + $0x1b0] sm:$0xff]
  %v1269 = vld [vmem:[#allocation2 + $0x1b8] sm:$0xff]
  %v1270 = vld [vmem:[#allocation2 + $0x1c0] sm:$0xff]
  %v1271 = vld [vmem:[#allocation2 + $0x1c8] sm:$0xff]
  %v1272 = vld [vmem:[#allocation2 + $0x1d0] sm:$0xff]
  %v1273 = vld [vmem:[#allocation2 + $0x1d8] sm:$0xff]
  %v1274 = vld [vmem:[#allocation2 + $0x1e0] sm:$0xff]
  %v1275 = vld [vmem:[#allocation2 + $0x1e8] sm:$0xff]
  %v1276 = vld [vmem:[#allocation2 + $0x1f0] sm:$0xff]
  %v1277 = vld [vmem:[#allocation2 + $0x1f8] sm:$0xff]
  %v1278 = vld [vmem:[#allocation2 + $0x200] sm:$0xff]
  %v1279 = vld [vmem:[#allocation2 + $0x208] sm:$0xff]
  %v1280 = vld [vmem:[#allocation2 + $0x210] sm:$0xff]
  %v1281 = vld [vmem:[#allocation2 + $0x218] sm:$0xff]
  %v1282 = vld [vmem:[#allocation2 + $0x220] sm:$0xff]
  %v1283 = vld [vmem:[#allocation2 + $0x228] sm:$0xff]
  %v1284 = vld [vmem:[#allocation2 + $0x230] sm:$0xff]
  %v1285 = vld [vmem:[#allocation2 + $0x238] sm:$0xff]
  %v1286 = vld [vmem:[#allocation2 + $0x240] sm:$0xff]
  %v1287 = vld [vmem:[#allocation2 + $0x248] sm:$0xff]
  %v1288 = vld [vmem:[#allocation2 + $0x250] sm:$0xff]
  %v1289 = vld [vmem:[#allocation2 + $0x258] sm:$0xff]
  %v1290 = vld [vmem:[#allocation2 + $0x260] sm:$0xff]
  %v1291 = vld [vmem:[#allocation2 + $0x268] sm:$0xff]
  %v1292 = vld [vmem:[#allocation2 + $0x270] sm:$0xff]
  %v1293 = vld [vmem:[#allocation2 + $0x278] sm:$0xff]
  %v1294 = vld [vmem:[#allocation2 + $0x280] sm:$0xff]
  %v1295 = vld [vmem:[#allocation2 + $0x288] sm:$0xff]
  %v1296 = vld [vmem:[#allocation2 + $0x290] sm:$0xff]
  %v1297 = vld [vmem:[#allocation2 + $0x298] sm:$0xff]
  %v1298 = vld [vmem:[#allocation2 + $0x2a0] sm:$0xff]
  %v1299 = vld [vmem:[#allocation2 + $0x2a8] sm:$0xff]
  %v1300 = vld [vmem:[#allocation2 + $0x2b0] sm:$0xff]
  %v1301 = vld [vmem:[#allocation2 + $0x2b8] sm:$0xff]
  %v1302 = vld [vmem:[#allocation2 + $0x2c0] sm:$0xff]
  %v1303 = vld [vmem:[#allocation2 + $0x2c8] sm:$0xff]
  %v1304 = vld [vmem:[#allocation2 + $0x2d0] sm:$0xff]
  %v1305 = vld [vmem:[#allocation2 + $0x2d8] sm:$0xff]
  %v1306 = vld [vmem:[#allocation2 + $0x2e0] sm:$0xff]
  %v1307 = vld [vmem:[#allocation2 + $0x2e8] sm:$0xff]
  %v1308 = vld [vmem:[#allocation2 + $0x2f0] sm:$0xff]
  %v1309 = vld [vmem:[#allocation2 + $0x2f8] sm:$0xff]
  %v1310 = vld [vmem:[#allocation2 + $0x300] sm:$0xff]
  %v1311 = vld [vmem:[#allocation2 + $0x308] sm:$0xff]
  %v1312 = vld [vmem:[#allocation2 + $0x310] sm:$0xff]
  %v1313 = vld [vmem:[#allocation2 + $0x318] sm:$0xff]
  %v1314 = vld [vmem:[#allocation2 + $0x320] sm:$0xff]
  %v1315 = vld [vmem:[#allocation2 + $0x328] sm:$0xff]
  %v1316 = vld [vmem:[#allocation2 + $0x330] sm:$0xff]
  %v1317 = vld [vmem:[#allocation2 + $0x338] sm:$0xff]
  %v1318 = vld [vmem:[#allocation2 + $0x340] sm:$0xff]
  %v1319 = vld [vmem:[#allocation2 + $0x348] sm:$0xff]
  %v1320 = vld [vmem:[#allocation2 + $0x350] sm:$0xff]
  %v1321 = vld [vmem:[#allocation2 + $0x358] sm:$0xff]
  %v1326 = vunpack.c.l.b16 %v1210
  %v1327 = vunpack.c.h.b16 %v1210
  %v1328 = vunpack.c.l.b16 %v1211
  %v1329 = vunpack.c.l.b16 %v1212
  %v1330 = vunpack.c.h.b16 %v1212
  %v1331 = vunpack.c.l.b16 %v1213
  %v1332 = vpack.c.b16 %v1329, %v1326
  %v1333 = vpack.c.b16 %v1330, %v1327
  %v1334 = vpack.c.b16 %v1331, %v1328
  %vm1337 = vcmask 261120
  %v1339 = vsel %vm1337, %v1334, 0
  %1341 = vmatprep.subr.bf16.mxu0 %v1215
  %1342 = vmatpush1.bf16.msra.mxu0 %v1214
  %1343 = vmatprep.subr.bf16.mxu0 %v1221
  %1344 = vmatpush1.bf16.msra.mxu0 %v1220
  %1345 = vmatprep.subr.bf16.mxu0 %v1227
  %1346 = vmatpush1.bf16.msra.mxu0 %v1226
  %1347 = vmatprep.subr.bf16.mxu0 %v1233
  %1348 = vmatpush1.bf16.msra.mxu0 %v1232
  %1349 = vmatprep.subr.bf16.mxu0 %v1239
  %1350 = vmatpush1.bf16.msra.mxu0 %v1238
  %1351 = vmatprep.subr.bf16.mxu0 %v1245
  %1352 = vmatpush1.bf16.msra.mxu0 %v1244
  %1353 = vmatprep.subr.bf16.mxu0 %v1251
  %1354 = vmatpush1.bf16.msra.mxu0 %v1250
  %1355 = vmatprep.subr.bf16.mxu0 %v1257
  %1356 = vmatpush1.bf16.msra.mxu0 %v1256
  %1357 = vmatprep.subr.bf16.mxu0 %v1263
  %1358 = vmatpush1.bf16.msra.mxu0 %v1262
  %1359 = vmatprep.subr.bf16.mxu0 %v1269
  %1360 = vmatpush1.bf16.msra.mxu0 %v1268
  %1361 = vmatprep.subr.bf16.mxu0 %v1275
  %1362 = vmatpush1.bf16.msra.mxu0 %v1274
  %1363 = vmatprep.subr.bf16.mxu0 %v1281
  %1364 = vmatpush1.bf16.msra.mxu0 %v1280
  %1365 = vmatprep.subr.bf16.mxu0 %v1287
  %1366 = vmatpush1.bf16.msra.mxu0 %v1286
  %1367 = vmatprep.subr.bf16.mxu0 %v1293
  %1368 = vmatpush1.bf16.msra.mxu0 %v1292
  %1369 = vmatprep.subr.bf16.mxu0 %v1299
  %1370 = vmatpush1.bf16.msra.mxu0 %v1298
  %1371 = vmatprep.subr.bf16.mxu0 %v1305
  %1372 = vmatpush1.bf16.msra.mxu0 %v1304
  %1373 = vmatprep.mubr.bf16.mxu0 %v1333
  %1374 = vmatmul.mubr.bf16.gmra.mrb[0].mxu0 %v1332
  %v1375 = vpop.f32.mrb[0].mxu0
  %v1376 = vadd.f32 0.0, %v1375
  %v1377 = vpop.f32.mrb[0].mxu0
  %v1378 = vadd.f32 0.0, %v1377
  %v1379 = vpop.f32.mrb[0].mxu0
  %v1380 = vadd.f32 0.0, %v1379
  %v1381 = vpop.f32.mrb[0].mxu0
  %v1382 = vadd.f32 0.0, %v1381
  %1383 = vdwg.mxu0
  %1384 = vmatprep.subr.bf16.mxu0 %v1311
  %1385 = vmatpush1.bf16.msra.mxu0 %v1310
  %1386 = vmatprep.subr.bf16.mxu0 %v1317
  %1387 = vmatpush1.bf16.msra.mxu0 %v1316
  %1388 = vmatprep.subr.bf16.mxu0 0
  %1389 = vmatpush1.bf16.msra.mxu0 0
  %1390 = vmatprep.subr.bf16.mxu0 0
  %1391 = vmatpush1.bf16.msra.mxu0 0
  %1392 = vmatprep.subr.bf16.mxu0 0
  %1393 = vmatpush1.bf16.msra.mxu0 0
  %1394 = vmatprep.subr.bf16.mxu0 0
  %1395 = vmatpush1.bf16.msra.mxu0 0
  %1396 = vmatprep.subr.bf16.mxu0 0
  %1397 = vmatpush1.bf16.msra.mxu0 0
  %1398 = vmatprep.subr.bf16.mxu0 0
  %1399 = vmatpush1.bf16.msra.mxu0 0
  %1400 = vmatprep.subr.bf16.mxu0 0
  %1401 = vmatpush1.bf16.msra.mxu0 0
  %1402 = vmatprep.subr.bf16.mxu0 0
  %1403 = vmatpush1.bf16.msra.mxu0 0
  %1404 = vmatprep.subr.bf16.mxu0 0
  %1405 = vmatpush1.bf16.msra.mxu0 0
  %1406 = vmatprep.subr.bf16.mxu0 0
  %1407 = vmatpush1.bf16.msra.mxu0 0
  %1408 = vmatprep.subr.bf16.mxu0 0
  %1409 = vmatpush1.bf16.msra.mxu0 0
  %1410 = vmatprep.subr.bf16.mxu0 0
  %1411 = vmatpush1.bf16.msra.mxu0 0
  %1412 = vmatprep.subr.bf16.mxu0 0
  %1413 = vmatpush1.bf16.msra.mxu0 0
  %1414 = vmatprep.subr.bf16.mxu0 0
  %1415 = vmatpush1.bf16.msra.mxu0 0
  %1416 = vmatprep.mubr.bf16.mxu0 0
  %1417 = vmatmul.mubr.bf16.gmra.mrb[0].mxu0 %v1339
  %v1418 = vpop.f32.mrb[0].mxu0
  %v1419 = vadd.f32 %v1376, %v1418
  %v1420 = vpop.f32.mrb[0].mxu0
  %v1421 = vadd.f32 %v1378, %v1420
  %v1422 = vpop.f32.mrb[0].mxu0
  %v1423 = vadd.f32 %v1380, %v1422
  %v1424 = vpop.f32.mrb[0].mxu0
  %v1425 = vadd.f32 %v1382, %v1424
  %1426 = vdwg.mxu0
  %1427 = vmatprep.subr.bf16.mxu0 %v1217
  %1428 = vmatpush1.bf16.msra.mxu0 %v1216
  %1429 = vmatprep.subr.bf16.mxu0 %v1223
  %1430 = vmatpush1.bf16.msra.mxu0 %v1222
  %1431 = vmatprep.subr.bf16.mxu0 %v1229
  %1432 = vmatpush1.bf16.msra.mxu0 %v1228
  %1433 = vmatprep.subr.bf16.mxu0 %v1235
  %1434 = vmatpush1.bf16.msra.mxu0 %v1234
  %1435 = vmatprep.subr.bf16.mxu0 %v1241
  %1436 = vmatpush1.bf16.msra.mxu0 %v1240
  %1437 = vmatprep.subr.bf16.mxu0 %v1247
  %1438 = vmatpush1.bf16.msra.mxu0 %v1246
  %1439 = vmatprep.subr.bf16.mxu0 %v1253
  %1440 = vmatpush1.bf16.msra.mxu0 %v1252
  %1441 = vmatprep.subr.bf16.mxu0 %v1259
  %1442 = vmatpush1.bf16.msra.mxu0 %v1258
  %1443 = vmatprep.subr.bf16.mxu0 %v1265
  %1444 = vmatpush1.bf16.msra.mxu0 %v1264
  %1445 = vmatprep.subr.bf16.mxu0 %v1271
  %1446 = vmatpush1.bf16.msra.mxu0 %v1270
  %1447 = vmatprep.subr.bf16.mxu0 %v1277
  %1448 = vmatpush1.bf16.msra.mxu0 %v1276
  %1449 = vmatprep.subr.bf16.mxu0 %v1283
  %1450 = vmatpush1.bf16.msra.mxu0 %v1282
  %1451 = vmatprep.subr.bf16.mxu0 %v1289
  %1452 = vmatpush1.bf16.msra.mxu0 %v1288
  %1453 = vmatprep.subr.bf16.mxu0 %v1295
  %1454 = vmatpush1.bf16.msra.mxu0 %v1294
  %1455 = vmatprep.subr.bf16.mxu0 %v1301
  %1456 = vmatpush1.bf16.msra.mxu0 %v1300
  %1457 = vmatprep.subr.bf16.mxu0 %v1307
  %1458 = vmatpush1.bf16.msra.mxu0 %v1306
  %1459 = vmatprep.mubr.bf16.mxu0 %v1333
  %1460 = vmatmul.mubr.bf16.gmra.mrb[0].mxu0 %v1332
  %v1461 = vpop.f32.mrb[0].mxu0
  %v1462 = vadd.f32 0.0, %v1461
  %v1463 = vpop.f32.mrb[0].mxu0
  %v1464 = vadd.f32 0.0, %v1463
  %v1465 = vpop.f32.mrb[0].mxu0
  %v1466 = vadd.f32 0.0, %v1465
  %v1467 = vpop.f32.mrb[0].mxu0
  %v1468 = vadd.f32 0.0, %v1467
  %1469 = vdwg.mxu0
  %1470 = vmatprep.subr.bf16.mxu0 %v1313
  %1471 = vmatpush1.bf16.msra.mxu0 %v1312
  %1472 = vmatprep.subr.bf16.mxu0 %v1319
  %1473 = vmatpush1.bf16.msra.mxu0 %v1318
  %1474 = vmatprep.subr.bf16.mxu0 0
  %1475 = vmatpush1.bf16.msra.mxu0 0
  %1476 = vmatprep.subr.bf16.mxu0 0
  %1477 = vmatpush1.bf16.msra.mxu0 0
  %1478 = vmatprep.subr.bf16.mxu0 0
  %1479 = vmatpush1.bf16.msra.mxu0 0
  %1480 = vmatprep.subr.bf16.mxu0 0
  %1481 = vmatpush1.bf16.msra.mxu0 0
  %1482 = vmatprep.subr.bf16.mxu0 0
  %1483 = vmatpush1.bf16.msra.mxu0 0
  %1484 = vmatprep.subr.bf16.mxu0 0
  %1485 = vmatpush1.bf16.msra.mxu0 0
  %1486 = vmatprep.subr.bf16.mxu0 0
  %1487 = vmatpush1.bf16.msra.mxu0 0
  %1488 = vmatprep.subr.bf16.mxu0 0
  %1489 = vmatpush1.bf16.msra.mxu0 0
  %1490 = vmatprep.subr.bf16.mxu0 0
  %1491 = vmatpush1.bf16.msra.mxu0 0
  %1492 = vmatprep.subr.bf16.mxu0 0
  %1493 = vmatpush1.bf16.msra.mxu0 0
  %1494 = vmatprep.subr.bf16.mxu0 0
  %1495 = vmatpush1.bf16.msra.mxu0 0
  %1496 = vmatprep.subr.bf16.mxu0 0
  %1497 = vmatpush1.bf16.msra.mxu0 0
  %1498 = vmatprep.subr.bf16.mxu0 0
  %1499 = vmatpush1.bf16.msra.mxu0 0
  %1500 = vmatprep.subr.bf16.mxu0 0
  %1501 = vmatpush1.bf16.msra.mxu0 0
  %1502 = vmatprep.mubr.bf16.mxu0 0
  %1503 = vmatmul.mubr.bf16.gmra.mrb[0].mxu0 %v1339
  %v1504 = vpop.f32.mrb[0].mxu0
  %v1505 = vadd.f32 %v1462, %v1504
  %v1506 = vpop.f32.mrb[0].mxu0
  %v1507 = vadd.f32 %v1464, %v1506
  %v1508 = vpop.f32.mrb[0].mxu0
  %v1509 = vadd.f32 %v1466, %v1508
  %v1510 = vpop.f32.mrb[0].mxu0
  %v1511 = vadd.f32 %v1468, %v1510
  %1512 = vdwg.mxu0
  %1513 = vmatprep.subr.bf16.mxu0 %v1219
  %1514 = vmatpush1.bf16.msra.mxu0 %v1218
  %1515 = vmatprep.subr.bf16.mxu0 %v1225
  %1516 = vmatpush1.bf16.msra.mxu0 %v1224
  %1517 = vmatprep.subr.bf16.mxu0 %v1231
  %1518 = vmatpush1.bf16.msra.mxu0 %v1230
  %1519 = vmatprep.subr.bf16.mxu0 %v1237
  %1520 = vmatpush1.bf16.msra.mxu0 %v1236
  %1521 = vmatprep.subr.bf16.mxu0 %v1243
  %1522 = vmatpush1.bf16.msra.mxu0 %v1242
  %1523 = vmatprep.subr.bf16.mxu0 %v1249
  %1524 = vmatpush1.bf16.msra.mxu0 %v1248
  %1525 = vmatprep.subr.bf16.mxu0 %v1255
  %1526 = vmatpush1.bf16.msra.mxu0 %v1254
  %1527 = vmatprep.subr.bf16.mxu0 %v1261
  %1528 = vmatpush1.bf16.msra.mxu0 %v1260
  %1529 = vmatprep.subr.bf16.mxu0 %v1267
  %1530 = vmatpush1.bf16.msra.mxu0 %v1266
  %1531 = vmatprep.subr.bf16.mxu0 %v1273
  %1532 = vmatpush1.bf16.msra.mxu0 %v1272
  %1533 = vmatprep.subr.bf16.mxu0 %v1279
  %1534 = vmatpush1.bf16.msra.mxu0 %v1278
  %1535 = vmatprep.subr.bf16.mxu0 %v1285
  %1536 = vmatpush1.bf16.msra.mxu0 %v1284
  %1537 = vmatprep.subr.bf16.mxu0 %v1291
  %1538 = vmatpush1.bf16.msra.mxu0 %v1290
  %1539 = vmatprep.subr.bf16.mxu0 %v1297
  %1540 = vmatpush1.bf16.msra.mxu0 %v1296
  %1541 = vmatprep.subr.bf16.mxu0 %v1303
  %1542 = vmatpush1.bf16.msra.mxu0 %v1302
  %1543 = vmatprep.subr.bf16.mxu0 %v1309
  %1544 = vmatpush1.bf16.msra.mxu0 %v1308
  %1545 = vmatprep.mubr.bf16.mxu0 %v1333
  %1546 = vmatmul.mubr.bf16.gmra.mrb[0].mxu0 %v1332
  %v1547 = vpop.f32.mrb[0].mxu0
  %v1548 = vadd.f32 0.0, %v1547
  %v1549 = vpop.f32.mrb[0].mxu0
  %v1550 = vadd.f32 0.0, %v1549
  %v1551 = vpop.f32.mrb[0].mxu0
  %v1552 = vadd.f32 0.0, %v1551
  %v1553 = vpop.f32.mrb[0].mxu0
  %v1554 = vadd.f32 0.0, %v1553
  %1555 = vdwg.mxu0
  %1556 = vmatprep.subr.bf16.mxu0 %v1315
  %1557 = vmatpush1.bf16.msra.mxu0 %v1314
  %1558 = vmatprep.subr.bf16.mxu0 %v1321
  %1559 = vmatpush1.bf16.msra.mxu0 %v1320
  %1560 = vmatprep.subr.bf16.mxu0 0
  %1561 = vmatpush1.bf16.msra.mxu0 0
  %1562 = vmatprep.subr.bf16.mxu0 0
  %1563 = vmatpush1.bf16.msra.mxu0 0
  %1564 = vmatprep.subr.bf16.mxu0 0
  %1565 = vmatpush1.bf16.msra.mxu0 0
  %1566 = vmatprep.subr.bf16.mxu0 0
  %1567 = vmatpush1.bf16.msra.mxu0 0
  %1568 = vmatprep.subr.bf16.mxu0 0
  %1569 = vmatpush1.bf16.msra.mxu0 0
  %1570 = vmatprep.subr.bf16.mxu0 0
  %1571 = vmatpush1.bf16.msra.mxu0 0
  %1572 = vmatprep.subr.bf16.mxu0 0
  %1573 = vmatpush1.bf16.msra.mxu0 0
  %1574 = vmatprep.subr.bf16.mxu0 0
  %1575 = vmatpush1.bf16.msra.mxu0 0
  %1576 = vmatprep.subr.bf16.mxu0 0
  %1577 = vmatpush1.bf16.msra.mxu0 0
  %1578 = vmatprep.subr.bf16.mxu0 0
  %1579 = vmatpush1.bf16.msra.mxu0 0
  %1580 = vmatprep.subr.bf16.mxu0 0
  %1581 = vmatpush1.bf16.msra.mxu0 0
  %1582 = vmatprep.subr.bf16.mxu0 0
  %1583 = vmatpush1.bf16.msra.mxu0 0
  %1584 = vmatprep.subr.bf16.mxu0 0
  %1585 = vmatpush1.bf16.msra.mxu0 0
  %1586 = vmatprep.subr.bf16.mxu0 0
  %1587 = vmatpush1.bf16.msra.mxu0 0
  %1588 = vmatprep.mubr.bf16.mxu0 0
  %1589 = vmatmul.mubr.bf16.gmra.mrb[0].mxu0 %v1339
  %v1590 = vpop.f32.mrb[0].mxu0
  %v1591 = vadd.f32 %v1548, %v1590
  %v1592 = vpop.f32.mrb[0].mxu0
  %v1593 = vadd.f32 %v1550, %v1592
  %v1594 = vpop.f32.mrb[0].mxu0
  %v1595 = vadd.f32 %v1552, %v1594
  %v1596 = vpop.f32.mrb[0].mxu0
  %v1597 = vadd.f32 %v1554, %v1596
  %1598 = vdwg.mxu0
  %1599 = vst [vmem:[%s2] sm:$0xff] %v1419
  %1600 = vst [vmem:[%s2 + $0x8] sm:$0xff] %v1421
  %1601 = vst [vmem:[%s2 + $0x10] sm:$0xff] %v1505
  %1602 = vst [vmem:[%s2 + $0x18] sm:$0xff] %v1507
  %1603 = vst [vmem:[%s2 + $0x20] sm:$0xff] %v1591
  %1604 = vst [vmem:[%s2 + $0x28] sm:$0xff] %v1593
  %1605 = vst [vmem:[%s2 + $0x30] sm:$0x7] %v1423
  %1606 = vst [vmem:[%s2 + $0x38] sm:$0x7] %v1425
  %1607 = vst [vmem:[%s2 + $0x40] sm:$0x7] %v1509
  %1608 = vst [vmem:[%s2 + $0x48] sm:$0x7] %v1511
  %1609 = vst [vmem:[%s2 + $0x50] sm:$0x7] %v1595
  %1610 = vst [vmem:[%s2 + $0x58] sm:$0x7] %v1597
  %v1611 = vsub.f32 0.0, %v1419
  %v1612 = vsub.f32 0.0, %v1421
  %v1613 = vsub.f32 0.0, %v1505
  %v1614 = vsub.f32 0.0, %v1507
  %v1615 = vsub.f32 0.0, %v1591
  %v1616 = vsub.f32 0.0, %v1593
  %v1617 = vsub.f32 0.0, %v1423
  %v1618 = vsub.f32 0.0, %v1425
  %v1619 = vsub.f32 0.0, %v1509
  %v1620 = vsub.f32 0.0, %v1511
  %v1621 = vsub.f32 0.0, %v1595
  %v1622 = vsub.f32 0.0, %v1597
  %v1623 = vmul.f32 %v1611, 1.442695
  %v1624 = vpow.pop %v1623
  %v1625 = vmul.f32 %v1612, 1.442695
  %v1626 = vpow.pop %v1625
  %v1627 = vmul.f32 %v1613, 1.442695
  %v1628 = vpow.pop %v1627
  %v1629 = vmul.f32 %v1614, 1.442695
  %v1630 = vpow.pop %v1629
  %v1631 = vmul.f32 %v1615, 1.442695
  %v1632 = vpow.pop %v1631
  %v1633 = vmul.f32 %v1616, 1.442695
  %v1634 = vpow.pop %v1633
  %v1635 = vmul.f32 %v1617, 1.442695
  %v1636 = vpow.pop %v1635
  %v1637 = vmul.f32 %v1618, 1.442695
  %v1638 = vpow.pop %v1637
  %v1639 = vmul.f32 %v1619, 1.442695
  %v1640 = vpow.pop %v1639
  %v1641 = vmul.f32 %v1620, 1.442695
  %v1642 = vpow.pop %v1641
  %v1643 = vmul.f32 %v1621, 1.442695
  %v1644 = vpow.pop %v1643
  %v1645 = vmul.f32 %v1622, 1.442695
  %v1646 = vpow.pop %v1645
  %v1647 = vadd.f32 %v1624, 1.0
  %v1648 = vadd.f32 %v1626, 1.0
  %v1649 = vadd.f32 %v1628, 1.0
  %v1650 = vadd.f32 %v1630, 1.0
  %v1651 = vadd.f32 %v1632, 1.0
  %v1652 = vadd.f32 %v1634, 1.0
  %v1653 = vadd.f32 %v1636, 1.0
  %v1654 = vadd.f32 %v1638, 1.0
  %v1655 = vadd.f32 %v1640, 1.0
  %v1656 = vadd.f32 %v1642, 1.0
  %v1657 = vadd.f32 %v1644, 1.0
  %v1658 = vadd.f32 %v1646, 1.0
  %v1659 = vrcp.pop %v1647
  %v1660 = vrcp.pop %v1648
  %v1661 = vrcp.pop %v1649
  %v1662 = vrcp.pop %v1650
  %v1663 = vrcp.pop %v1651
  %v1664 = vrcp.pop %v1652
  %v1665 = vrcp.pop %v1653
  %v1666 = vrcp.pop %v1654
  %v1667 = vrcp.pop %v1655
  %v1668 = vrcp.pop %v1656
  %v1669 = vrcp.pop %v1657
  %v1670 = vrcp.pop %v1658
  %1671 = vst [vmem:[%s3] sm:$0xff] %v1659
  %1672 = vst [vmem:[%s3 + $0x8] sm:$0xff] %v1660
  %1673 = vst [vmem:[%s3 + $0x10] sm:$0xff] %v1661
  %1674 = vst [vmem:[%s3 + $0x18] sm:$0xff] %v1662
  %1675 = vst [vmem:[%s3 + $0x20] sm:$0xff] %v1663
  %1676 = vst [vmem:[%s3 + $0x28] sm:$0xff] %v1664
  %1677 = vst [vmem:[%s3 + $0x30] sm:$0x7] %v1665
  %1678 = vst [vmem:[%s3 + $0x38] sm:$0x7] %v1666
  %1679 = vst [vmem:[%s3 + $0x40] sm:$0x7] %v1667
  %1680 = vst [vmem:[%s3 + $0x48] sm:$0x7] %v1668
  %1681 = vst [vmem:[%s3 + $0x50] sm:$0x7] %v1669
  %1682 = vst [vmem:[%s3 + $0x58] sm:$0x7] %v1670
  // Predicated region
  $region10: #{pshead_v2_forward.1} parent=0 // pred_check
    _
  $region11: #{pshead_v2_forward.1} parent=0 // pred_check_branch
    %1684 = sbr.rel (0) target = $region13
  $region12: #{pshead_v2_forward.1} parent=0 // pred_region
    _
  $region13: #{pshead_v2_forward.1} parent=0 // pred_fallthru
    _
  // Predicated region
  $region14: #{pshead_v2_forward.1} parent=0 // pred_check
    _
  $region15: #{pshead_v2_forward.1} parent=0 // pred_check_branch
    %1686 = sbr.rel (0) target = $region17
  $region16: #{pshead_v2_forward.1} parent=0 // pred_region
    _
  $region17: #{pshead_v2_forward.1} parent=0 // pred_fallthru
    _
  // Predicated region
  $region18: #{pshead_v2_forward.1} parent=0 // pred_check
    _
  $region19: #{pshead_v2_forward.1} parent=0 // pred_check_branch
    %1688 = sbr.rel (0) target = $region21
  $region20: #{pshead_v2_forward.1} parent=0 // pred_region
    _
  $region21: #{pshead_v2_forward.1} parent=0 // pred_fallthru
    _
  // Predicated region
  $region22: #{pshead_v2_forward.1} parent=0 // pred_check
    _
  $region23: #{pshead_v2_forward.1} parent=0 // pred_check_branch
    %1690 = sbr.rel (0) target = $region25
  $region24: #{pshead_v2_forward.1} parent=0 // pred_region
    _
  $region25: #{pshead_v2_forward.1} parent=0 // pred_fallthru
    _

</llo_original>
